<compile_context>
chip_gen: v7x
topology: tpu7x:2x2x1
jax: 0.10.0
libtpu: 0.0.40
codegen_flags: <defaults>
</compile_context>

<pallas_src>
import warnings

import numpy as np
import jax
import jax.numpy as jnp
from jax.experimental import pallas as pl
from jax.experimental.pallas import tpu as pltpu

# ---- small config, structurally consistent with jigsawModel1D ----
# original module: C_in=36, C_out=512, K=19, L=2048 -> L_out=2030,
#                  attention(2030), fc: 1024->512, fc2: 512->50
B = 2
C_IN = 4
C_OUT = 16
K = 3
L = 18
L_OUT = L - K + 1             # SelfAttention input_size (== 2030 originally)
FC_IN = 2 * C_OUT             # concat((attn*x, x), dim=1)   (== 1024 originally)
FC_OUT = C_OUT                # (== 512 originally)
NUM_CLASSES = 50


def _round_up(n, m):
    return ((n + m - 1) // m) * m


L_PAD = _round_up(L_OUT, 128)              # lane-dense time axis (2030 -> 2048)
L_X_PAD = _round_up(L_PAD + K - 1, 128)    # raw-x lanes: every k-shift slice in-bounds
TS = 512 if L_PAD % 512 == 0 else 128      # attention output-time chunk width
N_CHUNKS = L_PAD // TS


# --------------------------------------------------------------------------
# Kernel
# --------------------------------------------------------------------------
def jigsaw_kernel(x_ref, mask_ref, wconv_ref, bconv_ref, wa_ref, ba_ref,
                  wfca_ref, wfcb_ref, bfc_ref, wfc2t_ref, bfc2_ref,
                  out_ref,
                  cols_scr, y32_scr, y16_scr, p_att_scr):
    s = pl.program_id(1)                                   # attention time chunk

    # ---- chunk 0: Conv1d (valid) + ReLU as ONE fused MXU matmul over C_IN*K ----
    @pl.when(s == 0)
    def _():
        # In-kernel im2col from the raw sample: cols[k*C_IN + i, t] = x[i, t+k].
        # Stored widened to f32 (robust 32-bit sublane-offset stores); the
        # matmul operand is cast back to bf16 for full-rate MXU.  Pad columns
        # (t >= L_OUT) carry junk but are zeroed by the mask below.
        for k in range(K):
            cols_scr[k * C_IN:(k + 1) * C_IN, :] = (
                x_ref[:, k:k + L_PAD].astype(jnp.float32))
        y = jnp.dot(wconv_ref[...], cols_scr[...].astype(jnp.bfloat16),
                    preferred_element_type=jnp.float32)
        y = jnp.maximum(y + bconv_ref[...], 0.0) * mask_ref[...]   # ReLU + pad mask
        y32_scr[...] = y                                   # exact copy (a*y, pooling)
        y16_scr[...] = y.astype(jnp.bfloat16)              # MXU operand copy
        p_att_scr[...] = jnp.zeros_like(p_att_scr)

    # ---- attention chunk: u = tanh(y @ Wa^T[:, chunk] + ba[chunk]) ----
    # softmax is over channels (sublane axis), so per-column chunking is exact.
    u = jnp.tanh(
        jnp.dot(y16_scr[...], wa_ref[...],
                preferred_element_type=jnp.float32) + ba_ref[...])
    m = jnp.max(u, axis=0, keepdims=True)
    e = jnp.exp(u - m)
    inv_den = pl.reciprocal(jnp.sum(e, axis=0, keepdims=True), approx=True)
    a = e * inv_den                                        # (C_OUT, TS)
    col0 = pl.multiple_of(s * TS, TS)
    x_att = a * y32_scr[:, pl.ds(col0, TS)]                # pad cols of y are 0
    p_att_scr[...] += jnp.sum(x_att, axis=1, keepdims=True)   # running time-sum

    # ---- last chunk: pooled means -> fc -> ReLU -> fc2, lane-dense row out ----
    @pl.when(s == pl.num_programs(1) - 1)
    def _():
        p_att = p_att_scr[...]                             # (C_OUT, 1) sum_t(a*y)
        p_y = jnp.sum(y32_scr[...], axis=1, keepdims=True)  # (C_OUT, 1) sum_t(y)
        # 1/L_OUT is folded into wfca/wfcb at prep time; the broadcast +
        # sublane-reduce keeps the fc chain in row orientation with no
        # transposes, so the output store is a single lane-dense row.
        h = jnp.maximum(
            jnp.sum(p_att * wfca_ref[...], axis=0, keepdims=True)
            + jnp.sum(p_y * wfcb_ref[...], axis=0, keepdims=True)
            + bfc_ref[...], 0.0)                           # (1, FC_OUT)
        logits = jnp.dot(h, wfc2t_ref[...],
                         preferred_element_type=jnp.float32) + bfc2_ref[...]
        out_ref[...] = logits.astype(out_ref.dtype)        # (1, NUM_CLASSES)


# --------------------------------------------------------------------------
# One-time parameter preprocessing (hoisted out of the per-call forward path)
# --------------------------------------------------------------------------
def prepare_params(params):
    w_conv, b_conv, w_a, b_a, w_fc, b_fc, w_fc2, b_fc2 = params
    # conv weight flattened k-major to match the in-kernel im2col row order
    wconv = (jnp.transpose(w_conv, (0, 2, 1))
             .reshape(C_OUT, K * C_IN).astype(jnp.bfloat16))
    bconv = b_conv.reshape(C_OUT, 1).astype(jnp.float32)
    # attention weight as Wa^T, zero-padded to (L_PAD, L_PAD), bf16 (full-rate MXU)
    wa_t = (jnp.zeros((L_PAD, L_PAD), jnp.float32)
            .at[:L_OUT, :L_OUT].set(w_a.T).astype(jnp.bfloat16))
    ba_row = jnp.zeros((1, L_PAD), jnp.float32).at[0, :L_OUT].set(b_a)
    # fc weights transposed for the row-oriented fc chain; mean divisor folded in
    inv_n = jnp.float32(1.0 / L_OUT)
    wfca_t = (w_fc[:, :C_OUT].T * inv_n).astype(jnp.float32)   # acts on sum_t(a*y)
    wfcb_t = (w_fc[:, C_OUT:].T * inv_n).astype(jnp.float32)   # acts on sum_t(y)
    bfc_row = b_fc.reshape(1, FC_OUT).astype(jnp.float32)
    wfc2_t = w_fc2.T.astype(jnp.float32)                       # (FC_OUT, NUM_CLASSES)
    bfc2_row = b_fc2.reshape(1, NUM_CLASSES).astype(jnp.float32)
    # {1,0} validity mask for padded time columns
    mask_row = (jnp.arange(L_PAD, dtype=jnp.int32) < L_OUT
                ).astype(jnp.float32).reshape(1, L_PAD)
    return (mask_row, wconv, bconv, wa_t, ba_row,
            wfca_t, wfcb_t, bfc_row, wfc2_t, bfc2_row)


# --------------------------------------------------------------------------
# pallas_call construction
# --------------------------------------------------------------------------
def _const_spec(shape, single_buffer):
    ndim = len(shape)
    index_map = lambda b, s, _n=ndim: (0,) * _n            # block index never changes
    if single_buffer:
        return pl.BlockSpec(shape, index_map, pipeline_mode=pl.Buffered(1))
    return pl.BlockSpec(shape, index_map)


def _vmem_limit_bytes(prep, single_buffer):
    def nb(a):
        return int(a.size) * a.dtype.itemsize
    (mask_row, wconv, bconv, wa_t, ba_row,
     wfca_t, wfcb_t, bfc_row, wfc2_t, bfc2_row) = prep
    # streamed (double-buffered) blocks
    streamed = 2 * (C_IN * L_X_PAD * 2          # raw x block, bf16
                    + L_PAD * TS * 2            # Wa^T chunk, bf16
                    + TS * 4                    # ba chunk
                    + NUM_CLASSES * 4)          # output row
    # constant-index weights (1 copy if single-buffered, else 2)
    const = sum(nb(a) for a in (mask_row, wconv, bconv, wfca_t, wfcb_t,
                                bfc_row, wfc2_t, bfc2_row))
    const *= 1 if single_buffer else 2
    # scratch residency
    scratch = (C_IN * K * L_PAD * 4             # im2col, f32
               + C_OUT * L_PAD * (4 + 2)        # y f32 + bf16 copies
               + C_OUT * 128 * 4)               # pooled accumulator (lane-padded)
    # live per-chunk temps (u, e, a, x_att, cast buffers, ...)
    act = 6 * C_OUT * TS * 4 + C_IN * K * L_PAD * 2
    need = int(1.3 * (streamed + const + scratch + act))
    try:
        cap = int(pltpu.get_tpu_info().vmem_capacity_bytes)
    except Exception:
        cap = 64 * 1024 * 1024
    return int(min(max(need, 8 * 1024 * 1024), int(cap * 0.9)))


def _build_call(prep, single_buffer):
    (mask_row, wconv, bconv, wa_t, ba_row,
     wfca_t, wfcb_t, bfc_row, wfc2_t, bfc2_row) = prep
    in_specs = [
        pl.BlockSpec((None, C_IN, L_X_PAD), lambda b, s: (b, 0, 0)),   # raw x (bf16)
        _const_spec(mask_row.shape, single_buffer),
        _const_spec(wconv.shape, single_buffer),
        _const_spec(bconv.shape, single_buffer),
        pl.BlockSpec((L_PAD, TS), lambda b, s: (0, s)),                # Wa^T chunk
        pl.BlockSpec((1, TS), lambda b, s: (0, s)),                    # ba chunk
        _const_spec(wfca_t.shape, single_buffer),
        _const_spec(wfcb_t.shape, single_buffer),
        _const_spec(bfc_row.shape, single_buffer),
        _const_spec(wfc2_t.shape, single_buffer),
        _const_spec(bfc2_row.shape, single_buffer),
    ]
    return pl.pallas_call(
        jigsaw_kernel,
        out_shape=jax.ShapeDtypeStruct((B, 1, NUM_CLASSES), jnp.float32),
        grid=(B, N_CHUNKS),
        in_specs=in_specs,
        out_specs=pl.BlockSpec((None, 1, NUM_CLASSES), lambda b, s: (b, 0, 0)),
        scratch_shapes=[
            pltpu.VMEM((C_IN * K, L_PAD), jnp.float32),    # im2col buffer
            pltpu.VMEM((C_OUT, L_PAD), jnp.float32),       # y (exact, a*y & pooling)
            pltpu.VMEM((C_OUT, L_PAD), jnp.bfloat16),      # y (bf16 MXU operand)
            pltpu.VMEM((C_OUT, 1), jnp.float32),           # running sum_t(a*y)
        ],
        compiler_params=pltpu.CompilerParams(
            # TODO(synk): on v7x (2 TCs) wa_t could be shared via core_map +
            # VMEM_SHARED instead of one copy per core; not needed at this size.
            dimension_semantics=("parallel", "arbitrary"),
            vmem_limit_bytes=_vmem_limit_bytes(prep, single_buffer)),
    )


def jigsaw_forward(x, prep):
    # Per-call work is only: pad the raw activation to L_X_PAD lanes + bf16 cast.
    x_b = jnp.pad(x.astype(jnp.bfloat16), ((0, 0), (0, 0), (0, L_X_PAD - L)))
    try:
        out = _build_call(prep, single_buffer=True)(x_b, *prep)
    except Exception as e:  # pragma: no cover - depends on jax/Mosaic version
        # Loud (stderr) fallback instead of a silent one: only the small
        # constant-index weights get double-buffered; wa_t is streamed anyway.
        warnings.warn(
            "single-buffered weight BlockSpecs rejected "
            f"({type(e).__name__}); falling back to default double buffering")
        out = _build_call(prep, single_buffer=False)(x_b, *prep)
    return out.reshape(B, NUM_CLASSES)


# --------------------------------------------------------------------------
# Pure-JAX reference (matches the PyTorch forward exactly) and init
# --------------------------------------------------------------------------
def reference(x, params):
    (w_conv, b_conv, w_a, b_a, w_fc, b_fc, w_fc2, b_fc2) = params
    with jax.default_matmul_precision("highest"):
        y = jax.lax.conv_general_dilated(
            x, w_conv, window_strides=(1,), padding="VALID",
            dimension_numbers=("NCH", "OIH", "NCH")) + b_conv[None, :, None]
        y = jnp.maximum(y, 0.0)
        u = jnp.tanh(jnp.einsum("bct,st->bcs", y, w_a) + b_a[None, None, :])
        a = jax.nn.softmax(u, axis=1)                      # softmax over channels
        x_att = a * y
        cat = jnp.concatenate([x_att, y], axis=1)
        pooled = jnp.mean(cat, axis=2)
        h = jnp.maximum(pooled @ w_fc.T + b_fc[None, :], 0.0)
        return h @ w_fc2.T + b_fc2[None, :]


def init_params(key):
    """Deterministic PyTorch-style uniform(-1/sqrt(fan_in), 1/sqrt(fan_in)) init."""
    ks = jax.random.split(key, 8)

    def u(k, shape, fan_in):
        bound = 1.0 / np.sqrt(fan_in)
        return jax.random.uniform(k, shape, jnp.float32, -bound, bound)

    w_conv = u(ks[0], (C_OUT, C_IN, K), C_IN * K)
    b_conv = u(ks[1], (C_OUT,), C_IN * K)
    w_a = u(ks[2], (L_OUT, L_OUT), L_OUT)
    b_a = u(ks[3], (L_OUT,), L_OUT)
    w_fc = u(ks[4], (FC_OUT, FC_IN), FC_IN)
    b_fc = u(ks[5], (FC_OUT,), FC_IN)
    w_fc2 = u(ks[6], (NUM_CLASSES, FC_OUT), FC_OUT)
    b_fc2 = u(ks[7], (NUM_CLASSES,), FC_OUT)
    return (w_conv, b_conv, w_a, b_a, w_fc, b_fc, w_fc2, b_fc2)


if __name__ == "__main__":
    key = jax.random.PRNGKey(0)
    k_x, k_p = jax.random.split(key)
    x = jax.random.normal(k_x, (B, C_IN, L), jnp.float32)
    params = init_params(k_p)
    prep = prepare_params(params)          # one-time prep, hoisted out of forward

    out = jax.block_until_ready(jigsaw_forward(x, prep))
    ref = jax.block_until_ready(reference(x, params))

    assert out.shape == (B, NUM_CLASSES)
    # tolerance reflects bf16 MXU conv/attention operands + approx reciprocal
    np.testing.assert_allclose(np.asarray(out), np.asarray(ref),
                               rtol=1e-2, atol=1e-2)
    print("KERNEL_OK")
</pallas_src>

<mosaic_0001>
module attributes {stable_mosaic.version = 11 : i64} {
  func.func @jigsaw_kernel(%arg0: i32, %arg1: i32, %arg2: memref<1x4x256xbf16, #tpu.memory_space<vmem>>, %arg3: memref<1x128xf32, #tpu.memory_space<vmem>>, %arg4: memref<16x12xbf16, #tpu.memory_space<vmem>>, %arg5: memref<16x1xf32, #tpu.memory_space<vmem>>, %arg6: memref<128x128xbf16, #tpu.memory_space<vmem>>, %arg7: memref<1x128xf32, #tpu.memory_space<vmem>>, %arg8: memref<16x16xf32, #tpu.memory_space<vmem>>, %arg9: memref<16x16xf32, #tpu.memory_space<vmem>>, %arg10: memref<1x16xf32, #tpu.memory_space<vmem>>, %arg11: memref<16x50xf32, #tpu.memory_space<vmem>>, %arg12: memref<1x50xf32, #tpu.memory_space<vmem>>, %arg13: memref<1x1x50xf32, #tpu.memory_space<vmem>>, %arg14: memref<12x128xf32, #tpu.memory_space<vmem>>, %arg15: memref<16x128xf32, #tpu.memory_space<vmem>>, %arg16: memref<16x128xbf16, #tpu.memory_space<vmem>>, %arg17: memref<16x1xf32, #tpu.memory_space<vmem>>) attributes {dimension_semantics = [#tpu.dimension_semantics<parallel>, #tpu.dimension_semantics<arbitrary>], iteration_bounds = array<i64: 2, 1>, scalar_prefetch = 0 : i64, scratch_operands = 4 : i64, tpu.core_type = #tpu.core_type<tc>, window_params = [{transform_indices = @transform_0, window_bounds = array<i64: 1, 4, 256>}, {pipeline_mode = #tpu.pipeline_mode<synchronous>, transform_indices = @transform_1, window_bounds = array<i64: 1, 128>}, {pipeline_mode = #tpu.pipeline_mode<synchronous>, transform_indices = @transform_2, window_bounds = array<i64: 16, 12>}, {pipeline_mode = #tpu.pipeline_mode<synchronous>, transform_indices = @transform_3, window_bounds = array<i64: 16, 1>}, {transform_indices = @transform_4, window_bounds = array<i64: 128, 128>}, {transform_indices = @transform_5, window_bounds = array<i64: 1, 128>}, {pipeline_mode = #tpu.pipeline_mode<synchronous>, transform_indices = @transform_6, window_bounds = array<i64: 16, 16>}, {pipeline_mode = #tpu.pipeline_mode<synchronous>, transform_indices = @transform_7, window_bounds = array<i64: 16, 16>}, {pipeline_mode = #tpu.pipeline_mode<synchronous>, transform_indices = @transform_8, window_bounds = array<i64: 1, 16>}, {pipeline_mode = #tpu.pipeline_mode<synchronous>, transform_indices = @transform_9, window_bounds = array<i64: 16, 50>}, {pipeline_mode = #tpu.pipeline_mode<synchronous>, transform_indices = @transform_10, window_bounds = array<i64: 1, 50>}, {transform_indices = @transform_11, window_bounds = array<i64: 1, 1, 50>}]} {
    %c0_i32 = arith.constant 0 : i32
    %0 = arith.cmpi eq, %arg1, %c0_i32 : i32
    %1 = arith.extui %0 : i1 to i32
    %c0_i32_0 = arith.constant 0 : i32
    %2 = arith.cmpi ne, %1, %c0_i32_0 : i32
    scf.if %2 {
      %c0_16 = arith.constant 0 : index
      %c0_17 = arith.constant 0 : index
      %c0_18 = arith.constant 0 : index
      %33 = vector.load %arg2[%c0_16, %c0_17, %c0_18] : memref<1x4x256xbf16, #tpu.memory_space<vmem>>, vector<1x4x128xbf16>
      %34 = vector.shape_cast %33 : vector<1x4x128xbf16> to vector<4x128xbf16>
      %35 = arith.extf %34 : vector<4x128xbf16> to vector<4x128xf32>
      %c0_19 = arith.constant 0 : index
      %c0_20 = arith.constant 0 : index
      %36 = vector.load %arg14[%c0_19, %c0_20] : memref<12x128xf32, #tpu.memory_space<vmem>>, vector<4x128xf32>
      tpu.vector_store %arg14[%c0_19, %c0_20], %35 {strides = array<i32>} : memref<12x128xf32, #tpu.memory_space<vmem>>, vector<4x128xf32>,
      %c0_21 = arith.constant 0 : index
      %c0_22 = arith.constant 0 : index
      %c1 = arith.constant 1 : index
      %37 = vector.load %arg2[%c0_21, %c0_22, %c1] : memref<1x4x256xbf16, #tpu.memory_space<vmem>>, vector<1x4x128xbf16>
      %38 = vector.shape_cast %37 : vector<1x4x128xbf16> to vector<4x128xbf16>
      %39 = arith.extf %38 : vector<4x128xbf16> to vector<4x128xf32>
      %c4 = arith.constant 4 : index
      %c0_23 = arith.constant 0 : index
      %40 = vector.load %arg14[%c4, %c0_23] : memref<12x128xf32, #tpu.memory_space<vmem>>, vector<4x128xf32>
      tpu.vector_store %arg14[%c4, %c0_23], %39 {strides = array<i32>} : memref<12x128xf32, #tpu.memory_space<vmem>>, vector<4x128xf32>,
      %c0_24 = arith.constant 0 : index
      %c0_25 = arith.constant 0 : index
      %c2 = arith.constant 2 : index
      %41 = vector.load %arg2[%c0_24, %c0_25, %c2] : memref<1x4x256xbf16, #tpu.memory_space<vmem>>, vector<1x4x128xbf16>
      %42 = vector.shape_cast %41 : vector<1x4x128xbf16> to vector<4x128xbf16>
      %43 = arith.extf %42 : vector<4x128xbf16> to vector<4x128xf32>
      %c8 = arith.constant 8 : index
      %c0_26 = arith.constant 0 : index
      %44 = vector.load %arg14[%c8, %c0_26] : memref<12x128xf32, #tpu.memory_space<vmem>>, vector<4x128xf32>
      tpu.vector_store %arg14[%c8, %c0_26], %43 {strides = array<i32>} : memref<12x128xf32, #tpu.memory_space<vmem>>, vector<4x128xf32>,
      %c0_27 = arith.constant 0 : index
      %c0_28 = arith.constant 0 : index
      %45 = vector.load %arg4[%c0_27, %c0_28] : memref<16x12xbf16, #tpu.memory_space<vmem>>, vector<16x12xbf16>
      %c0_29 = arith.constant 0 : index
      %c0_30 = arith.constant 0 : index
      %46 = vector.load %arg14[%c0_29, %c0_30] : memref<12x128xf32, #tpu.memory_space<vmem>>, vector<12x128xf32>
      %47 = arith.truncf %46 : vector<12x128xf32> to vector<12x128xbf16>
      %cst_31 = arith.constant dense<0.000000e+00> : vector<16x128xf32>
      %48 = tpu.matmul %45, %47, %cst_31 {dimension_numbers = #tpu.dot_dimension_numbers<[1], [0], [0], [1], [0, 0, 1, 1], [], []>} : vector<16x12xbf16>, vector<12x128xbf16>, vector<16x128xf32> -> vector<16x128xf32>
      %c0_32 = arith.constant 0 : index
      %c0_33 = arith.constant 0 : index
      %49 = vector.load %arg5[%c0_32, %c0_33] : memref<16x1xf32, #tpu.memory_space<vmem>>, vector<16x1xf32>
      %50 = vector.broadcast %49 : vector<16x1xf32> to vector<16x128xf32>
      %51 = arith.addf %48, %50 : vector<16x128xf32>
      %cst_34 = arith.constant 0.000000e+00 : f32
      %52 = vector.broadcast %cst_34 : f32 to vector<16x128xf32>
      %53 = arith.maximumf %51, %52 : vector<16x128xf32>
      %c0_35 = arith.constant 0 : index
      %c0_36 = arith.constant 0 : index
      %54 = vector.load %arg3[%c0_35, %c0_36] : memref<1x128xf32, #tpu.memory_space<vmem>>, vector<1x128xf32>
      %55 = vector.broadcast %54 : vector<1x128xf32> to vector<16x128xf32>
      %56 = arith.mulf %53, %55 : vector<16x128xf32>
      %c0_37 = arith.constant 0 : index
      %c0_38 = arith.constant 0 : index
      %57 = vector.load %arg15[%c0_37, %c0_38] : memref<16x128xf32, #tpu.memory_space<vmem>>, vector<16x128xf32>
      tpu.vector_store %arg15[%c0_37, %c0_38], %56 {strides = array<i32>} : memref<16x128xf32, #tpu.memory_space<vmem>>, vector<16x128xf32>,
      %58 = arith.truncf %56 : vector<16x128xf32> to vector<16x128xbf16>
      %c0_39 = arith.constant 0 : index
      %c0_40 = arith.constant 0 : index
      %59 = vector.load %arg16[%c0_39, %c0_40] : memref<16x128xbf16, #tpu.memory_space<vmem>>, vector<16x128xbf16>
      tpu.vector_store %arg16[%c0_39, %c0_40], %58 {strides = array<i32>} : memref<16x128xbf16, #tpu.memory_space<vmem>>, vector<16x128xbf16>,
      %cst_41 = arith.constant 0.000000e+00 : f32
      %60 = vector.broadcast %cst_41 : f32 to vector<16x1xf32>
      %c0_42 = arith.constant 0 : index
      %c0_43 = arith.constant 0 : index
      %61 = vector.load %arg17[%c0_42, %c0_43] : memref<16x1xf32, #tpu.memory_space<vmem>>, vector<16x1xf32>
      tpu.vector_store %arg17[%c0_42, %c0_43], %60 {strides = array<i32>} : memref<16x1xf32, #tpu.memory_space<vmem>>, vector<16x1xf32>,
    } else {
    }
    %c0 = arith.constant 0 : index
    %c0_1 = arith.constant 0 : index
    %3 = vector.load %arg16[%c0, %c0_1] : memref<16x128xbf16, #tpu.memory_space<vmem>>, vector<16x128xbf16>
    %c0_2 = arith.constant 0 : index
    %c0_3 = arith.constant 0 : index
    %4 = vector.load %arg6[%c0_2, %c0_3] : memref<128x128xbf16, #tpu.memory_space<vmem>>, vector<128x128xbf16>
    %cst = arith.constant dense<0.000000e+00> : vector<16x128xf32>
    %5 = tpu.matmul %3, %4, %cst {dimension_numbers = #tpu.dot_dimension_numbers<[1], [0], [0], [1], [0, 0, 1, 1], [], []>} : vector<16x128xbf16>, vector<128x128xbf16>, vector<16x128xf32> -> vector<16x128xf32>
    %c0_4 = arith.constant 0 : index
    %c0_5 = arith.constant 0 : index
    %6 = vector.load %arg7[%c0_4, %c0_5] : memref<1x128xf32, #tpu.memory_space<vmem>>, vector<1x128xf32>
    %7 = vector.broadcast %6 : vector<1x128xf32> to vector<16x128xf32>
    %8 = arith.addf %5, %7 : vector<16x128xf32>
    %9 = math.tanh %8 : vector<16x128xf32>
    %cst_6 = arith.constant dense<0xFF800000> : vector<128xf32>
    %10 = vector.multi_reduction <maximumf>, %9, %cst_6 [0] : vector<16x128xf32> to vector<128xf32>
    %11 = vector.shape_cast %10 : vector<128xf32> to vector<1x128xf32>
    %12 = vector.broadcast %11 : vector<1x128xf32> to vector<16x128xf32>
    %13 = arith.subf %9, %12 : vector<16x128xf32>
    %14 = math.exp %13 : vector<16x128xf32>
    %cst_7 = arith.constant dense<0.000000e+00> : vector<128xf32>
    %15 = vector.multi_reduction <add>, %14, %cst_7 [0] : vector<16x128xf32> to vector<128xf32>
    %16 = vector.shape_cast %15 : vector<128xf32> to vector<1x128xf32>
    %17 = tpu.reciprocal %16 {approx = true} : vector<1x128xf32> -> vector<1x128xf32>
    %18 = vector.broadcast %17 : vector<1x128xf32> to vector<16x128xf32>
    %19 = arith.mulf %14, %18 : vector<16x128xf32>
    %c128_i32 = arith.constant 128 : i32
    %20 = arith.muli %arg1, %c128_i32 : i32
    %21 = tpu.assume_multiple %20, 128 : i32
    %c0_8 = arith.constant 0 : index
    %22 = arith.index_cast %21 : i32 to index
    %23 = vector.load %arg15[%c0_8, %22] : memref<16x128xf32, #tpu.memory_space<vmem>>, vector<16x128xf32>
    %24 = arith.mulf %19, %23 : vector<16x128xf32>
    %c0_9 = arith.constant 0 : index
    %c0_10 = arith.constant 0 : index
    %25 = vector.load %arg17[%c0_9, %c0_10] : memref<16x1xf32, #tpu.memory_space<vmem>>, vector<16x1xf32>
    %cst_11 = arith.constant dense<0.000000e+00> : vector<16xf32>
    %26 = vector.multi_reduction <add>, %24, %cst_11 [1] : vector<16x128xf32> to vector<16xf32>
    %27 = vector.shape_cast %26 : vector<16xf32> to vector<16x1xf32>
    %28 = arith.addf %25, %27 : vector<16x1xf32>
    %c0_12 = arith.constant 0 : index
    %c0_13 = arith.constant 0 : index
    %29 = vector.load %arg17[%c0_12, %c0_13] : memref<16x1xf32, #tpu.memory_space<vmem>>, vector<16x1xf32>
    tpu.vector_store %arg17[%c0_12, %c0_13], %28 {strides = array<i32>} : memref<16x1xf32, #tpu.memory_space<vmem>>, vector<16x1xf32>,
    %c0_i32_14 = arith.constant 0 : i32
    %30 = arith.cmpi eq, %arg1, %c0_i32_14 : i32
    %31 = arith.extui %30 : i1 to i32
    %c0_i32_15 = arith.constant 0 : i32
    %32 = arith.cmpi ne, %31, %c0_i32_15 : i32
    scf.if %32 {
      %c0_16 = arith.constant 0 : index
      %c0_17 = arith.constant 0 : index
      %33 = vector.load %arg17[%c0_16, %c0_17] : memref<16x1xf32, #tpu.memory_space<vmem>>, vector<16x1xf32>
      %c0_18 = arith.constant 0 : index
      %c0_19 = arith.constant 0 : index
      %34 = vector.load %arg15[%c0_18, %c0_19] : memref<16x128xf32, #tpu.memory_space<vmem>>, vector<16x128xf32>
      %cst_20 = arith.constant dense<0.000000e+00> : vector<16xf32>
      %35 = vector.multi_reduction <add>, %34, %cst_20 [1] : vector<16x128xf32> to vector<16xf32>
      %36 = vector.shape_cast %35 : vector<16xf32> to vector<16x1xf32>
      %c0_21 = arith.constant 0 : index
      %c0_22 = arith.constant 0 : index
      %37 = vector.load %arg8[%c0_21, %c0_22] : memref<16x16xf32, #tpu.memory_space<vmem>>, vector<16x16xf32>
      %38 = vector.broadcast %33 : vector<16x1xf32> to vector<16x16xf32>
      %39 = arith.mulf %38, %37 : vector<16x16xf32>
      %cst_23 = arith.constant dense<0.000000e+00> : vector<16xf32>
      %40 = vector.multi_reduction <add>, %39, %cst_23 [0] : vector<16x16xf32> to vector<16xf32>
      %41 = vector.shape_cast %40 : vector<16xf32> to vector<1x16xf32>
      %c0_24 = arith.constant 0 : index
      %c0_25 = arith.constant 0 : index
      %42 = vector.load %arg9[%c0_24, %c0_25] : memref<16x16xf32, #tpu.memory_space<vmem>>, vector<16x16xf32>
      %43 = vector.broadcast %36 : vector<16x1xf32> to vector<16x16xf32>
      %44 = arith.mulf %43, %42 : vector<16x16xf32>
      %cst_26 = arith.constant dense<0.000000e+00> : vector<16xf32>
      %45 = vector.multi_reduction <add>, %44, %cst_26 [0] : vector<16x16xf32> to vector<16xf32>
      %46 = vector.shape_cast %45 : vector<16xf32> to vector<1x16xf32>
      %47 = arith.addf %41, %46 : vector<1x16xf32>
      %c0_27 = arith.constant 0 : index
      %c0_28 = arith.constant 0 : index
      %48 = vector.load %arg10[%c0_27, %c0_28] : memref<1x16xf32, #tpu.memory_space<vmem>>, vector<1x16xf32>
      %49 = arith.addf %47, %48 : vector<1x16xf32>
      %cst_29 = arith.constant 0.000000e+00 : f32
      %50 = vector.broadcast %cst_29 : f32 to vector<1x16xf32>
      %51 = arith.maximumf %49, %50 : vector<1x16xf32>
      %c0_30 = arith.constant 0 : index
      %c0_31 = arith.constant 0 : index
      %52 = vector.load %arg11[%c0_30, %c0_31] : memref<16x50xf32, #tpu.memory_space<vmem>>, vector<16x50xf32>
      %cst_32 = arith.constant dense<0.000000e+00> : vector<1x50xf32>
      %53 = tpu.matmul %51, %52, %cst_32 {dimension_numbers = #tpu.dot_dimension_numbers<[1], [0], [0], [1], [0, 0, 1, 1], [], []>} : vector<1x16xf32>, vector<16x50xf32>, vector<1x50xf32> -> vector<1x50xf32>
      %c0_33 = arith.constant 0 : index
      %c0_34 = arith.constant 0 : index
      %54 = vector.load %arg12[%c0_33, %c0_34] : memref<1x50xf32, #tpu.memory_space<vmem>>, vector<1x50xf32>
      %55 = arith.addf %53, %54 : vector<1x50xf32>
      %c0_35 = arith.constant 0 : index
      %c0_36 = arith.constant 0 : index
      %c0_37 = arith.constant 0 : index
      %56 = vector.load %arg13[%c0_35, %c0_36, %c0_37] : memref<1x1x50xf32, #tpu.memory_space<vmem>>, vector<1x1x50xf32>
      %57 = vector.shape_cast %56 : vector<1x1x50xf32> to vector<1x50xf32>
      %58 = vector.shape_cast %55 : vector<1x50xf32> to vector<1x1x50xf32>
      tpu.vector_store %arg13[%c0_35, %c0_36, %c0_37], %58 {strides = array<i32>} : memref<1x1x50xf32, #tpu.memory_space<vmem>>, vector<1x1x50xf32>,
    } else {
    }
    return
  }
  func.func @transform_0(%arg0: i32, %arg1: i32) -> (i32, i32, i32) {
    %c0_i32 = arith.constant 0 : i32
    %c0_i32_0 = arith.constant 0 : i32
    %c0_i32_1 = arith.constant 0 : i32
    return %arg0, %c0_i32, %c0_i32_0 : i32, i32, i32
  }
  func.func @transform_1(%arg0: i32, %arg1: i32) -> (i32, i32) {
    %c0_i32 = arith.constant 0 : i32
    %c0_i32_0 = arith.constant 0 : i32
    %c0_i32_1 = arith.constant 0 : i32
    return %c0_i32, %c0_i32_0 : i32, i32
  }
  func.func @transform_2(%arg0: i32, %arg1: i32) -> (i32, i32) {
    %c0_i32 = arith.constant 0 : i32
    %c0_i32_0 = arith.constant 0 : i32
    %c0_i32_1 = arith.constant 0 : i32
    return %c0_i32, %c0_i32_0 : i32, i32
  }
  func.func @transform_3(%arg0: i32, %arg1: i32) -> (i32, i32) {
    %c0_i32 = arith.constant 0 : i32
    %c0_i32_0 = arith.constant 0 : i32
    %c0_i32_1 = arith.constant 0 : i32
    return %c0_i32, %c0_i32_0 : i32, i32
  }
  func.func @transform_4(%arg0: i32, %arg1: i32) -> (i32, i32) {
    %c0_i32 = arith.constant 0 : i32
    %c0_i32_0 = arith.constant 0 : i32
    return %c0_i32, %arg1 : i32, i32
  }
  func.func @transform_5(%arg0: i32, %arg1: i32) -> (i32, i32) {
    %c0_i32 = arith.constant 0 : i32
    %c0_i32_0 = arith.constant 0 : i32
    return %c0_i32, %arg1 : i32, i32
  }
  func.func @transform_6(%arg0: i32, %arg1: i32) -> (i32, i32) {
    %c0_i32 = arith.constant 0 : i32
    %c0_i32_0 = arith.constant 0 : i32
    %c0_i32_1 = arith.constant 0 : i32
    return %c0_i32, %c0_i32_0 : i32, i32
  }
  func.func @transform_7(%arg0: i32, %arg1: i32) -> (i32, i32) {
    %c0_i32 = arith.constant 0 : i32
    %c0_i32_0 = arith.constant 0 : i32
    %c0_i32_1 = arith.constant 0 : i32
    return %c0_i32, %c0_i32_0 : i32, i32
  }
  func.func @transform_8(%arg0: i32, %arg1: i32) -> (i32, i32) {
    %c0_i32 = arith.constant 0 : i32
    %c0_i32_0 = arith.constant 0 : i32
    %c0_i32_1 = arith.constant 0 : i32
    return %c0_i32, %c0_i32_0 : i32, i32
  }
  func.func @transform_9(%arg0: i32, %arg1: i32) -> (i32, i32) {
    %c0_i32 = arith.constant 0 : i32
    %c0_i32_0 = arith.constant 0 : i32
    %c0_i32_1 = arith.constant 0 : i32
    return %c0_i32, %c0_i32_0 : i32, i32
  }
  func.func @transform_10(%arg0: i32, %arg1: i32) -> (i32, i32) {
    %c0_i32 = arith.constant 0 : i32
    %c0_i32_0 = arith.constant 0 : i32
    %c0_i32_1 = arith.constant 0 : i32
    return %c0_i32, %c0_i32_0 : i32, i32
  }
  func.func @transform_11(%arg0: i32, %arg1: i32) -> (i32, i32, i32) {
    %c0_i32 = arith.constant 0 : i32
    %c0_i32_0 = arith.constant 0 : i32
    %c0_i32_1 = arith.constant 0 : i32
    return %arg0, %c0_i32, %c0_i32_0 : i32, i32, i32
  }
}

module attributes {stable_mosaic.version = 11 : i64} {
  func.func @jigsaw_kernel(%arg0: i32, %arg1: i32, %arg2: memref<1x4x256xbf16, #tpu.memory_space<vmem>>, %arg3: memref<1x128xf32, #tpu.memory_space<vmem>>, %arg4: memref<16x12xbf16, #tpu.memory_space<vmem>>, %arg5: memref<16x1xf32, #tpu.memory_space<vmem>>, %arg6: memref<128x128xbf16, #tpu.memory_space<vmem>>, %arg7: memref<1x128xf32, #tpu.memory_space<vmem>>, %arg8: memref<16x16xf32, #tpu.memory_space<vmem>>, %arg9: memref<16x16xf32, #tpu.memory_space<vmem>>, %arg10: memref<1x16xf32, #tpu.memory_space<vmem>>, %arg11: memref<16x50xf32, #tpu.memory_space<vmem>>, %arg12: memref<1x50xf32, #tpu.memory_space<vmem>>, %arg13: memref<1x1x50xf32, #tpu.memory_space<vmem>>, %arg14: memref<12x128xf32, #tpu.memory_space<vmem>>, %arg15: memref<16x128xf32, #tpu.memory_space<vmem>>, %arg16: memref<16x128xbf16, #tpu.memory_space<vmem>>, %arg17: memref<16x1xf32, #tpu.memory_space<vmem>>) attributes {dimension_semantics = [#tpu.dimension_semantics<parallel>, #tpu.dimension_semantics<arbitrary>], iteration_bounds = array<i64: 2, 1>, scalar_prefetch = 0 : i64, scratch_operands = 4 : i64, tpu.core_type = #tpu.core_type<tc>, window_params = [{transform_indices = @transform_0, window_bounds = array<i64: 1, 4, 256>}, {pipeline_mode = #tpu.pipeline_mode<synchronous>, transform_indices = @transform_1, window_bounds = array<i64: 1, 128>}, {pipeline_mode = #tpu.pipeline_mode<synchronous>, transform_indices = @transform_2, window_bounds = array<i64: 16, 12>}, {pipeline_mode = #tpu.pipeline_mode<synchronous>, transform_indices = @transform_3, window_bounds = array<i64: 16, 1>}, {transform_indices = @transform_4, window_bounds = array<i64: 128, 128>}, {transform_indices = @transform_5, window_bounds = array<i64: 1, 128>}, {pipeline_mode = #tpu.pipeline_mode<synchronous>, transform_indices = @transform_6, window_bounds = array<i64: 16, 16>}, {pipeline_mode = #tpu.pipeline_mode<synchronous>, transform_indices = @transform_7, window_bounds = array<i64: 16, 16>}, {pipeline_mode = #tpu.pipeline_mode<synchronous>, transform_indices = @transform_8, window_bounds = array<i64: 1, 16>}, {pipeline_mode = #tpu.pipeline_mode<synchronous>, transform_indices = @transform_9, window_bounds = array<i64: 16, 50>}, {pipeline_mode = #tpu.pipeline_mode<synchronous>, transform_indices = @transform_10, window_bounds = array<i64: 1, 50>}, {transform_indices = @transform_11, window_bounds = array<i64: 1, 1, 50>}]} {
    %c0_i32 = arith.constant 0 : i32
    %0 = arith.cmpi eq, %arg1, %c0_i32 : i32
    %1 = arith.extui %0 : i1 to i32
    %c0_i32_0 = arith.constant 0 : i32
    %2 = arith.cmpi ne, %1, %c0_i32_0 : i32
    scf.if %2 {
      %c0_16 = arith.constant 0 : index
      %c0_17 = arith.constant 0 : index
      %c0_18 = arith.constant 0 : index
      %33 = vector.load %arg2[%c0_16, %c0_17, %c0_18] : memref<1x4x256xbf16, #tpu.memory_space<vmem>>, vector<1x4x128xbf16>
      %34 = vector.shape_cast %33 : vector<1x4x128xbf16> to vector<4x128xbf16>
      %35 = arith.extf %34 : vector<4x128xbf16> to vector<4x128xf32>
      %c0_19 = arith.constant 0 : index
      %c0_20 = arith.constant 0 : index
      %36 = vector.load %arg14[%c0_19, %c0_20] : memref<12x128xf32, #tpu.memory_space<vmem>>, vector<4x128xf32>
      tpu.vector_store %arg14[%c0_19, %c0_20], %35 {strides = array<i32>} : memref<12x128xf32, #tpu.memory_space<vmem>>, vector<4x128xf32>,
      %c0_21 = arith.constant 0 : index
      %c0_22 = arith.constant 0 : index
      %c1 = arith.constant 1 : index
      %37 = vector.load %arg2[%c0_21, %c0_22, %c1] : memref<1x4x256xbf16, #tpu.memory_space<vmem>>, vector<1x4x128xbf16>
      %38 = vector.shape_cast %37 : vector<1x4x128xbf16> to vector<4x128xbf16>
      %39 = arith.extf %38 : vector<4x128xbf16> to vector<4x128xf32>
      %c4 = arith.constant 4 : index
      %c0_23 = arith.constant 0 : index
      %40 = vector.load %arg14[%c4, %c0_23] : memref<12x128xf32, #tpu.memory_space<vmem>>, vector<4x128xf32>
      tpu.vector_store %arg14[%c4, %c0_23], %39 {strides = array<i32>} : memref<12x128xf32, #tpu.memory_space<vmem>>, vector<4x128xf32>,
      %c0_24 = arith.constant 0 : index
      %c0_25 = arith.constant 0 : index
      %c2 = arith.constant 2 : index
      %41 = vector.load %arg2[%c0_24, %c0_25, %c2] : memref<1x4x256xbf16, #tpu.memory_space<vmem>>, vector<1x4x128xbf16>
      %42 = vector.shape_cast %41 : vector<1x4x128xbf16> to vector<4x128xbf16>
      %43 = arith.extf %42 : vector<4x128xbf16> to vector<4x128xf32>
      %c8 = arith.constant 8 : index
      %c0_26 = arith.constant 0 : index
      %44 = vector.load %arg14[%c8, %c0_26] : memref<12x128xf32, #tpu.memory_space<vmem>>, vector<4x128xf32>
      tpu.vector_store %arg14[%c8, %c0_26], %43 {strides = array<i32>} : memref<12x128xf32, #tpu.memory_space<vmem>>, vector<4x128xf32>,
      %c0_27 = arith.constant 0 : index
      %c0_28 = arith.constant 0 : index
      %45 = vector.load %arg4[%c0_27, %c0_28] : memref<16x12xbf16, #tpu.memory_space<vmem>>, vector<16x12xbf16>
      %c0_29 = arith.constant 0 : index
      %c0_30 = arith.constant 0 : index
      %46 = vector.load %arg14[%c0_29, %c0_30] : memref<12x128xf32, #tpu.memory_space<vmem>>, vector<12x128xf32>
      %47 = arith.truncf %46 : vector<12x128xf32> to vector<12x128xbf16>
      %cst_31 = arith.constant dense<0.000000e+00> : vector<16x128xf32>
      %48 = tpu.matmul %45, %47, %cst_31 {dimension_numbers = #tpu.dot_dimension_numbers<[1], [0], [0], [1], [0, 0, 1, 1], [], []>} : vector<16x12xbf16>, vector<12x128xbf16>, vector<16x128xf32> -> vector<16x128xf32>
      %c0_32 = arith.constant 0 : index
      %c0_33 = arith.constant 0 : index
      %49 = vector.load %arg5[%c0_32, %c0_33] : memref<16x1xf32, #tpu.memory_space<vmem>>, vector<16x1xf32>
      %50 = vector.broadcast %49 : vector<16x1xf32> to vector<16x128xf32>
      %51 = arith.addf %48, %50 : vector<16x128xf32>
      %cst_34 = arith.constant 0.000000e+00 : f32
      %52 = vector.broadcast %cst_34 : f32 to vector<16x128xf32>
      %53 = arith.maximumf %51, %52 : vector<16x128xf32>
      %c0_35 = arith.constant 0 : index
      %c0_36 = arith.constant 0 : index
      %54 = vector.load %arg3[%c0_35, %c0_36] : memref<1x128xf32, #tpu.memory_space<vmem>>, vector<1x128xf32>
      %55 = vector.broadcast %54 : vector<1x128xf32> to vector<16x128xf32>
      %56 = arith.mulf %53, %55 : vector<16x128xf32>
      %c0_37 = arith.constant 0 : index
      %c0_38 = arith.constant 0 : index
      %57 = vector.load %arg15[%c0_37, %c0_38] : memref<16x128xf32, #tpu.memory_space<vmem>>, vector<16x128xf32>
      tpu.vector_store %arg15[%c0_37, %c0_38], %56 {strides = array<i32>} : memref<16x128xf32, #tpu.memory_space<vmem>>, vector<16x128xf32>,
      %58 = arith.truncf %56 : vector<16x128xf32> to vector<16x128xbf16>
      %c0_39 = arith.constant 0 : index
      %c0_40 = arith.constant 0 : index
      %59 = vector.load %arg16[%c0_39, %c0_40] : memref<16x128xbf16, #tpu.memory_space<vmem>>, vector<16x128xbf16>
      tpu.vector_store %arg16[%c0_39, %c0_40], %58 {strides = array<i32>} : memref<16x128xbf16, #tpu.memory_space<vmem>>, vector<16x128xbf16>,
      %cst_41 = arith.constant 0.000000e+00 : f32
      %60 = vector.broadcast %cst_41 : f32 to vector<16x1xf32>
      %c0_42 = arith.constant 0 : index
      %c0_43 = arith.constant 0 : index
      %61 = vector.load %arg17[%c0_42, %c0_43] : memref<16x1xf32, #tpu.memory_space<vmem>>, vector<16x1xf32>
      tpu.vector_store %arg17[%c0_42, %c0_43], %60 {strides = array<i32>} : memref<16x1xf32, #tpu.memory_space<vmem>>, vector<16x1xf32>,
    } else {
    }
    %c0 = arith.constant 0 : index
    %c0_1 = arith.constant 0 : index
    %3 = vector.load %arg16[%c0, %c0_1] : memref<16x128xbf16, #tpu.memory_space<vmem>>, vector<16x128xbf16>
    %c0_2 = arith.constant 0 : index
    %c0_3 = arith.constant 0 : index
    %4 = vector.load %arg6[%c0_2, %c0_3] : memref<128x128xbf16, #tpu.memory_space<vmem>>, vector<128x128xbf16>
    %cst = arith.constant dense<0.000000e+00> : vector<16x128xf32>
    %5 = tpu.matmul %3, %4, %cst {dimension_numbers = #tpu.dot_dimension_numbers<[1], [0], [0], [1], [0, 0, 1, 1], [], []>} : vector<16x128xbf16>, vector<128x128xbf16>, vector<16x128xf32> -> vector<16x128xf32>
    %c0_4 = arith.constant 0 : index
    %c0_5 = arith.constant 0 : index
    %6 = vector.load %arg7[%c0_4, %c0_5] : memref<1x128xf32, #tpu.memory_space<vmem>>, vector<1x128xf32>
    %7 = vector.broadcast %6 : vector<1x128xf32> to vector<16x128xf32>
    %8 = arith.addf %5, %7 : vector<16x128xf32>
    %9 = math.tanh %8 : vector<16x128xf32>
    %cst_6 = arith.constant dense<0xFF800000> : vector<128xf32>
    %10 = vector.multi_reduction <maximumf>, %9, %cst_6 [0] : vector<16x128xf32> to vector<128xf32>
    %11 = vector.shape_cast %10 : vector<128xf32> to vector<1x128xf32>
    %12 = vector.broadcast %11 : vector<1x128xf32> to vector<16x128xf32>
    %13 = arith.subf %9, %12 : vector<16x128xf32>
    %14 = math.exp %13 : vector<16x128xf32>
    %cst_7 = arith.constant dense<0.000000e+00> : vector<128xf32>
    %15 = vector.multi_reduction <add>, %14, %cst_7 [0] : vector<16x128xf32> to vector<128xf32>
    %16 = vector.shape_cast %15 : vector<128xf32> to vector<1x128xf32>
    %17 = tpu.reciprocal %16 {approx = true} : vector<1x128xf32> -> vector<1x128xf32>
    %18 = vector.broadcast %17 : vector<1x128xf32> to vector<16x128xf32>
    %19 = arith.mulf %14, %18 : vector<16x128xf32>
    %c128_i32 = arith.constant 128 : i32
    %20 = arith.muli %arg1, %c128_i32 : i32
    %21 = tpu.assume_multiple %20, 128 : i32
    %c0_8 = arith.constant 0 : index
    %22 = arith.index_cast %21 : i32 to index
    %23 = vector.load %arg15[%c0_8, %22] : memref<16x128xf32, #tpu.memory_space<vmem>>, vector<16x128xf32>
    %24 = arith.mulf %19, %23 : vector<16x128xf32>
    %c0_9 = arith.constant 0 : index
    %c0_10 = arith.constant 0 : index
    %25 = vector.load %arg17[%c0_9, %c0_10] : memref<16x1xf32, #tpu.memory_space<vmem>>, vector<16x1xf32>
    %cst_11 = arith.constant dense<0.000000e+00> : vector<16xf32>
    %26 = vector.multi_reduction <add>, %24, %cst_11 [1] : vector<16x128xf32> to vector<16xf32>
    %27 = vector.shape_cast %26 : vector<16xf32> to vector<16x1xf32>
    %28 = arith.addf %25, %27 : vector<16x1xf32>
    %c0_12 = arith.constant 0 : index
    %c0_13 = arith.constant 0 : index
    %29 = vector.load %arg17[%c0_12, %c0_13] : memref<16x1xf32, #tpu.memory_space<vmem>>, vector<16x1xf32>
    tpu.vector_store %arg17[%c0_12, %c0_13], %28 {strides = array<i32>} : memref<16x1xf32, #tpu.memory_space<vmem>>, vector<16x1xf32>,
    %c0_i32_14 = arith.constant 0 : i32
    %30 = arith.cmpi eq, %arg1, %c0_i32_14 : i32
    %31 = arith.extui %30 : i1 to i32
    %c0_i32_15 = arith.constant 0 : i32
    %32 = arith.cmpi ne, %31, %c0_i32_15 : i32
    scf.if %32 {
      %c0_16 = arith.constant 0 : index
      %c0_17 = arith.constant 0 : index
      %33 = vector.load %arg17[%c0_16, %c0_17] : memref<16x1xf32, #tpu.memory_space<vmem>>, vector<16x1xf32>
      %c0_18 = arith.constant 0 : index
      %c0_19 = arith.constant 0 : index
      %34 = vector.load %arg15[%c0_18, %c0_19] : memref<16x128xf32, #tpu.memory_space<vmem>>, vector<16x128xf32>
      %cst_20 = arith.constant dense<0.000000e+00> : vector<16xf32>
      %35 = vector.multi_reduction <add>, %34, %cst_20 [1] : vector<16x128xf32> to vector<16xf32>
      %36 = vector.shape_cast %35 : vector<16xf32> to vector<16x1xf32>
      %c0_21 = arith.constant 0 : index
      %c0_22 = arith.constant 0 : index
      %37 = vector.load %arg8[%c0_21, %c0_22] : memref<16x16xf32, #tpu.memory_space<vmem>>, vector<16x16xf32>
      %38 = vector.broadcast %33 : vector<16x1xf32> to vector<16x16xf32>
      %39 = arith.mulf %38, %37 : vector<16x16xf32>
      %cst_23 = arith.constant dense<0.000000e+00> : vector<16xf32>
      %40 = vector.multi_reduction <add>, %39, %cst_23 [0] : vector<16x16xf32> to vector<16xf32>
      %41 = vector.shape_cast %40 : vector<16xf32> to vector<1x16xf32>
      %c0_24 = arith.constant 0 : index
      %c0_25 = arith.constant 0 : index
      %42 = vector.load %arg9[%c0_24, %c0_25] : memref<16x16xf32, #tpu.memory_space<vmem>>, vector<16x16xf32>
      %43 = vector.broadcast %36 : vector<16x1xf32> to vector<16x16xf32>
      %44 = arith.mulf %43, %42 : vector<16x16xf32>
      %cst_26 = arith.constant dense<0.000000e+00> : vector<16xf32>
      %45 = vector.multi_reduction <add>, %44, %cst_26 [0] : vector<16x16xf32> to vector<16xf32>
      %46 = vector.shape_cast %45 : vector<16xf32> to vector<1x16xf32>
      %47 = arith.addf %41, %46 : vector<1x16xf32>
      %c0_27 = arith.constant 0 : index
      %c0_28 = arith.constant 0 : index
      %48 = vector.load %arg10[%c0_27, %c0_28] : memref<1x16xf32, #tpu.memory_space<vmem>>, vector<1x16xf32>
      %49 = arith.addf %47, %48 : vector<1x16xf32>
      %cst_29 = arith.constant 0.000000e+00 : f32
      %50 = vector.broadcast %cst_29 : f32 to vector<1x16xf32>
      %51 = arith.maximumf %49, %50 : vector<1x16xf32>
      %c0_30 = arith.constant 0 : index
      %c0_31 = arith.constant 0 : index
      %52 = vector.load %arg11[%c0_30, %c0_31] : memref<16x50xf32, #tpu.memory_space<vmem>>, vector<16x50xf32>
      %cst_32 = arith.constant dense<0.000000e+00> : vector<1x50xf32>
      %53 = tpu.matmul %51, %52, %cst_32 {dimension_numbers = #tpu.dot_dimension_numbers<[1], [0], [0], [1], [0, 0, 1, 1], [], []>} : vector<1x16xf32>, vector<16x50xf32>, vector<1x50xf32> -> vector<1x50xf32>
      %c0_33 = arith.constant 0 : index
      %c0_34 = arith.constant 0 : index
      %54 = vector.load %arg12[%c0_33, %c0_34] : memref<1x50xf32, #tpu.memory_space<vmem>>, vector<1x50xf32>
      %55 = arith.addf %53, %54 : vector<1x50xf32>
      %c0_35 = arith.constant 0 : index
      %c0_36 = arith.constant 0 : index
      %c0_37 = arith.constant 0 : index
      %56 = vector.load %arg13[%c0_35, %c0_36, %c0_37] : memref<1x1x50xf32, #tpu.memory_space<vmem>>, vector<1x1x50xf32>
      %57 = vector.shape_cast %56 : vector<1x1x50xf32> to vector<1x50xf32>
      %58 = vector.shape_cast %55 : vector<1x50xf32> to vector<1x1x50xf32>
      tpu.vector_store %arg13[%c0_35, %c0_36, %c0_37], %58 {strides = array<i32>} : memref<1x1x50xf32, #tpu.memory_space<vmem>>, vector<1x1x50xf32>,
    } else {
    }
    return
  }
  func.func @transform_0(%arg0: i32, %arg1: i32) -> (i32, i32, i32) {
    %c0_i32 = arith.constant 0 : i32
    %c0_i32_0 = arith.constant 0 : i32
    %c0_i32_1 = arith.constant 0 : i32
    return %arg0, %c0_i32, %c0_i32_0 : i32, i32, i32
  }
  func.func @transform_1(%arg0: i32, %arg1: i32) -> (i32, i32) {
    %c0_i32 = arith.constant 0 : i32
    %c0_i32_0 = arith.constant 0 : i32
    %c0_i32_1 = arith.constant 0 : i32
    return %c0_i32, %c0_i32_0 : i32, i32
  }
  func.func @transform_2(%arg0: i32, %arg1: i32) -> (i32, i32) {
    %c0_i32 = arith.constant 0 : i32
    %c0_i32_0 = arith.constant 0 : i32
    %c0_i32_1 = arith.constant 0 : i32
    return %c0_i32, %c0_i32_0 : i32, i32
  }
  func.func @transform_3(%arg0: i32, %arg1: i32) -> (i32, i32) {
    %c0_i32 = arith.constant 0 : i32
    %c0_i32_0 = arith.constant 0 : i32
    %c0_i32_1 = arith.constant 0 : i32
    return %c0_i32, %c0_i32_0 : i32, i32
  }
  func.func @transform_4(%arg0: i32, %arg1: i32) -> (i32, i32) {
    %c0_i32 = arith.constant 0 : i32
    %c0_i32_0 = arith.constant 0 : i32
    return %c0_i32, %arg1 : i32, i32
  }
  func.func @transform_5(%arg0: i32, %arg1: i32) -> (i32, i32) {
    %c0_i32 = arith.constant 0 : i32
    %c0_i32_0 = arith.constant 0 : i32
    return %c0_i32, %arg1 : i32, i32
  }
  func.func @transform_6(%arg0: i32, %arg1: i32) -> (i32, i32) {
    %c0_i32 = arith.constant 0 : i32
    %c0_i32_0 = arith.constant 0 : i32
    %c0_i32_1 = arith.constant 0 : i32
    return %c0_i32, %c0_i32_0 : i32, i32
  }
  func.func @transform_7(%arg0: i32, %arg1: i32) -> (i32, i32) {
    %c0_i32 = arith.constant 0 : i32
    %c0_i32_0 = arith.constant 0 : i32
    %c0_i32_1 = arith.constant 0 : i32
    return %c0_i32, %c0_i32_0 : i32, i32
  }
  func.func @transform_8(%arg0: i32, %arg1: i32) -> (i32, i32) {
    %c0_i32 = arith.constant 0 : i32
    %c0_i32_0 = arith.constant 0 : i32
    %c0_i32_1 = arith.constant 0 : i32
    return %c0_i32, %c0_i32_0 : i32, i32
  }
  func.func @transform_9(%arg0: i32, %arg1: i32) -> (i32, i32) {
    %c0_i32 = arith.constant 0 : i32
    %c0_i32_0 = arith.constant 0 : i32
    %c0_i32_1 = arith.constant 0 : i32
    return %c0_i32, %c0_i32_0 : i32, i32
  }
  func.func @transform_10(%arg0: i32, %arg1: i32) -> (i32, i32) {
    %c0_i32 = arith.constant 0 : i32
    %c0_i32_0 = arith.constant 0 : i32
    %c0_i32_1 = arith.constant 0 : i32
    return %c0_i32, %c0_i32_0 : i32, i32
  }
  func.func @transform_11(%arg0: i32, %arg1: i32) -> (i32, i32, i32) {
    %c0_i32 = arith.constant 0 : i32
    %c0_i32_0 = arith.constant 0 : i32
    %c0_i32_1 = arith.constant 0 : i32
    return %arg0, %c0_i32, %c0_i32_0 : i32, i32, i32
  }
}

</mosaic_0001>

<llo_original>
// kernel: tpu_custom_call.1
$region0: #{tpu_custom_call.1}
  #allocation0 [shape = 'u32[]', space=smem, size = 0x4, offset = 0x4, fixed_abs, tag = 'smem constant byte address 0x4 - core index']
  #allocation1 [shape = 'u32[144,128]{1,0:T(1,128)}', space=vmem, size = 0x12000, scoped, tag = 'internal scratch']
  #allocation2 [shape = 'f32[12,128]{1,0:T(8,128)}', space=vmem, size = 0x2000, scoped, tag = 'scratch operand']
  #allocation3 [shape = 'f32[16,128]{1,0:T(8,128)}', space=vmem, size = 0x2000, scoped, tag = 'scratch operand']
  #allocation4 [shape = 'bf16[16,128]{1,0:T(16,128)(2,1)}', space=vmem, size = 0x1000, scoped, tag = 'scratch operand']
  #allocation5 [shape = 'f32[16,1]{1,0:T(8,128)}', space=vmem, size = 0x2000, scoped, tag = 'scratch operand']
  %s0 = inlined_call_operand.hbm [shape: bf16[2,4,256], index: 0, kind: input, shape index: {}]
  %s1 = inlined_call_operand.hbm [shape: f32[1,128], index: 1, kind: input, shape index: {}]
  %s2 = inlined_call_operand.hbm [shape: bf16[16,12], index: 2, kind: input, shape index: {}]
  %s3 = inlined_call_operand.vmem [shape: f32[16,1], index: 3, kind: input, shape index: {}]
  %s4 = inlined_call_operand.hbm [shape: bf16[128,128], index: 4, kind: input, shape index: {}]
  %s5 = inlined_call_operand.vmem [shape: f32[1,128], index: 5, kind: input, shape index: {}]
  %s6 = inlined_call_operand.vmem [shape: f32[16,16], index: 6, kind: input, shape index: {}]
  %s7 = inlined_call_operand.vmem [shape: f32[16,16], index: 7, kind: input, shape index: {}]
  %s8 = inlined_call_operand.vmem [shape: f32[1,16], index: 8, kind: input, shape index: {}]
  %s9 = inlined_call_operand.vmem [shape: f32[16,50], index: 9, kind: input, shape index: {}]
  %s10 = inlined_call_operand.vmem [shape: f32[1,50], index: 10, kind: input, shape index: {}]
  %s11 = inlined_call_operand.hbm [shape: f32[2,1,50], index: 11, kind: output, shape index: {}]
  %s12 = sld [smem:[#allocation0]]
  $region101: #{tpu_custom_call.1} parent=0
    _
  %s14 = ssub.s32 1, %s12
  %s15 = scalar_select 0, %s14, %s12
  $region1: #{tpu_custom_call.1} parent=0
    #allocation6 [shape = 'u8[4096]{0}', space=vmem, size = 0x1000, scoped, tag = 'input window, operand 0']
    #allocation7 [shape = 's32[2]{0}', space=sflag, size = 0x8, scoped, tag = 'scoped memory for tpu_custom_call.1']
    #allocation8 [shape = 's32[2]{0}', space=sflag, size = 0x8, scoped, tag = 'scoped memory for tpu_custom_call.1']
    #allocation9 [shape = 'u8[512]{0}', space=vmem, size = 0x400, scoped, tag = 'input window, operand 1, single buffered']
    #allocation10 [shape = 's32[1]{0}', space=sflag, size = 0x4, scoped, tag = 'scoped memory for tpu_custom_call.1']
    #allocation11 [shape = 'u8[4096]{0}', space=vmem, size = 0x1000, scoped, tag = 'input window, operand 2, single buffered']
    #allocation12 [shape = 'u8[32768]{0}', space=vmem, size = 0x8000, scoped, tag = 'input window, operand 4, single buffered']
    #allocation13 [shape = 's32[1]{0}', space=sflag, size = 0x4, scoped, tag = 'scoped memory for tpu_custom_call.1']
    #allocation14 [shape = 'u8[1024]{0}', space=vmem, size = 0x400, scoped, tag = 'output window, operand 0']
    %16 = vsyncpa [#allocation7], 0
    %s17 = scalar_lea.sflag [#allocation7], 1
    %18 = vsyncpa %s17, 0
    %19 = vsyncpa [#allocation10], 0
    %20 = vsyncpa [#allocation13], 0
    %21 = vsyncpa [#allocation8], 0
    %s22 = scalar_lea.sflag [#allocation8], 1
    %23 = vsyncpa %s22, 0
    loop: start=0, step=1, limit=4
    $region2: #{tpu_custom_call.1} parent=1 // loop_pre_header
      _
    $region3: #{tpu_custom_call.1} parent=1 // loop_header
      %s25 = sphi 0, %s29
      %p26 = scmp.ge.s32.totalorder %s25, 4
      %s32 = sphi 0, %s44
      %s33 = sphi 0, %s40
      %s34 = sphi 0, %s32
      %s35 = sphi 0, %s33
      %s36 = sphi 0, %s34
      %s37 = sphi 0, %s35
      %s47 = sphi 0, %s49
      %s50 = sphi 0, %s47
      %s51 = sphi 0, %s50
      %s67 = sphi 0, %s51
      %s71 = sphi 0, %s71
      %s73 = sphi 0, %s71
      %s74 = sphi 0, %s73
      %s88 = sphi 0, %s74
      %s92 = sphi 0, %s92
      %s94 = sphi 0, %s92
      %s95 = sphi 0, %s94
      %s109 = sphi 0, %s95
      %s113 = sphi 0, %s113
      %s115 = sphi 0, %s113
      %s116 = sphi 0, %s115
      %s130 = sphi 0, %s116
      %s136 = sphi 0, %s138
      %s139 = sphi 0, %s136
      %s140 = sphi 0, %s139
      %s156 = sphi 0, %s140
      %s162 = sphi 0, %s164
      %s165 = sphi 0, %s162
      %s166 = sphi 0, %s165
      %s182 = sphi 0, %s166
      %s186 = sphi 0, %s186
      %s188 = sphi 0, %s186
      %s189 = sphi 0, %s188
      %s203 = sphi 0, %s189
      %s207 = sphi 0, %s207
      %s209 = sphi 0, %s207
      %s210 = sphi 0, %s209
      %s224 = sphi 0, %s210
      %s228 = sphi 0, %s228
      %s230 = sphi 0, %s228
      %s231 = sphi 0, %s230
      %s245 = sphi 0, %s231
      %s249 = sphi 0, %s249
      %s251 = sphi 0, %s249
      %s252 = sphi 0, %s251
      %s266 = sphi 0, %s252
      %s270 = sphi 0, %s270
      %s272 = sphi 0, %s270
      %s273 = sphi 0, %s272
      %s287 = sphi 0, %s273
      %s293 = sphi 0, %s295
      %s296 = sphi 0, %s293
      %s297 = sphi 0, %s296
      %s313 = sphi 0, %s297
    $region4: #{tpu_custom_call.1} parent=1 // loop_header_branch
      %28 = sbr.rel (%p26) target = $region8
    $region5: #{tpu_custom_call.1} parent=1 // loop_body
      %s30 = ssub.s32 %s25, 1
      %s31 = ssub.s32 %s25, 2
      %s38 = sadd.s32 1, %s33
      %p39 = scmp.ge.s32.totalorder %s38, 1
      %s40 = scalar_select %p39, 0, %s38
      %s41 = sadd.s32 1, %s32
      %s42 = scalar_select %p39, %s41, %s32
      %p43 = scmp.ge.s32.totalorder %s42, 2
      %s44 = scalar_select %p43, 0, %s42
      %s45 = ssub.s32 %s32, %s44
      %p46 = scmp.eq.s32.totalorder %s45, 0
      %s48 = sadd.s32 %s47, 1
      %s49 = scalar_select %p46, %s47, %s48
      %p52 = pneg %p46
      %p53 = scmp.eq.s32.totalorder %s25, 1
      %p54 = por %p52, %p53
      %p55 = scmp.ne.s32.totalorder %s47, %s50
      %p56 = scmp.eq.s32.totalorder %s25, 0
      %p57 = por %p55, %p56
      %p58 = scmp.ne.s32.totalorder %s47, %s50
      %p59 = scmp.eq.s32.totalorder %s30, 1
      %p60 = por %p58, %p59
      %p61 = scmp.ne.s32.totalorder %s50, %s51
      %p62 = scmp.eq.s32.totalorder %s30, 0
      %p63 = por %p61, %p62
      %p64 = scmp.ne.s32.totalorder %s50, %s51
      %p65 = scmp.eq.s32.totalorder %s31, 1
      %p66 = por %p64, %p65
      %p68 = scmp.ne.s32.totalorder %s51, %s67
      %p69 = scmp.eq.s32.totalorder %s31, 0
      %p70 = por %p68, %p69
      %s72 = sadd.s32 %s71, 1
      %p75 = scmp.eq.s32.totalorder %s25, 1
      %p76 = scmp.ne.s32.totalorder %s71, %s73
      %p77 = scmp.eq.s32.totalorder %s25, 0
      %p78 = por %p76, %p77
      %p79 = scmp.ne.s32.totalorder %s71, %s73
      %p80 = scmp.eq.s32.totalorder %s30, 1
      %p81 = por %p79, %p80
      %p82 = scmp.ne.s32.totalorder %s73, %s74
      %p83 = scmp.eq.s32.totalorder %s30, 0
      %p84 = por %p82, %p83
      %p85 = scmp.ne.s32.totalorder %s73, %s74
      %p86 = scmp.eq.s32.totalorder %s31, 1
      %p87 = por %p85, %p86
      %p89 = scmp.ne.s32.totalorder %s74, %s88
      %p90 = scmp.eq.s32.totalorder %s31, 0
      %p91 = por %p89, %p90
      %s93 = sadd.s32 %s92, 1
      %p96 = scmp.eq.s32.totalorder %s25, 1
      %p97 = scmp.ne.s32.totalorder %s92, %s94
      %p98 = scmp.eq.s32.totalorder %s25, 0
      %p99 = por %p97, %p98
      %p100 = scmp.ne.s32.totalorder %s92, %s94
      %p101 = scmp.eq.s32.totalorder %s30, 1
      %p102 = por %p100, %p101
      %p103 = scmp.ne.s32.totalorder %s94, %s95
      %p104 = scmp.eq.s32.totalorder %s30, 0
      %p105 = por %p103, %p104
      %p106 = scmp.ne.s32.totalorder %s94, %s95
      %p107 = scmp.eq.s32.totalorder %s31, 1
      %p108 = por %p106, %p107
      %p110 = scmp.ne.s32.totalorder %s95, %s109
      %p111 = scmp.eq.s32.totalorder %s31, 0
      %p112 = por %p110, %p111
      %s114 = sadd.s32 %s113, 1
      %p117 = scmp.eq.s32.totalorder %s25, 1
      %p118 = scmp.ne.s32.totalorder %s113, %s115
      %p119 = scmp.eq.s32.totalorder %s25, 0
      %p120 = por %p118, %p119
      %p121 = scmp.ne.s32.totalorder %s113, %s115
      %p122 = scmp.eq.s32.totalorder %s30, 1
      %p123 = por %p121, %p122
      %p124 = scmp.ne.s32.totalorder %s115, %s116
      %p125 = scmp.eq.s32.totalorder %s30, 0
      %p126 = por %p124, %p125
      %p127 = scmp.ne.s32.totalorder %s115, %s116
      %p128 = scmp.eq.s32.totalorder %s31, 1
      %p129 = por %p127, %p128
      %p131 = scmp.ne.s32.totalorder %s116, %s130
      %p132 = scmp.eq.s32.totalorder %s31, 0
      %p133 = por %p131, %p132
      %s134 = ssub.s32 %s33, %s40
      %p135 = scmp.eq.s32.totalorder %s134, 0
      %s137 = sadd.s32 %s136, 1
      %s138 = scalar_select %p135, %s136, %s137
      %p141 = pneg %p135
      %p142 = scmp.eq.s32.totalorder %s25, 1
      %p143 = por %p141, %p142
      %p144 = scmp.ne.s32.totalorder %s136, %s139
      %p145 = scmp.eq.s32.totalorder %s25, 0
      %p146 = por %p144, %p145
      %p147 = scmp.ne.s32.totalorder %s136, %s139
      %p148 = scmp.eq.s32.totalorder %s30, 1
      %p149 = por %p147, %p148
      %p150 = scmp.ne.s32.totalorder %s139, %s140
      %p151 = scmp.eq.s32.totalorder %s30, 0
      %p152 = por %p150, %p151
      %p153 = scmp.ne.s32.totalorder %s139, %s140
      %p154 = scmp.eq.s32.totalorder %s31, 1
      %p155 = por %p153, %p154
      %p157 = scmp.ne.s32.totalorder %s140, %s156
      %p158 = scmp.eq.s32.totalorder %s31, 0
      %p159 = por %p157, %p158
      %s160 = ssub.s32 %s33, %s40
      %p161 = scmp.eq.s32.totalorder %s160, 0
      %s163 = sadd.s32 %s162, 1
      %s164 = scalar_select %p161, %s162, %s163
      %p167 = pneg %p161
      %p168 = scmp.eq.s32.totalorder %s25, 1
      %p169 = por %p167, %p168
      %p170 = scmp.ne.s32.totalorder %s162, %s165
      %p171 = scmp.eq.s32.totalorder %s25, 0
      %p172 = por %p170, %p171
      %p173 = scmp.ne.s32.totalorder %s162, %s165
      %p174 = scmp.eq.s32.totalorder %s30, 1
      %p175 = por %p173, %p174
      %p176 = scmp.ne.s32.totalorder %s165, %s166
      %p177 = scmp.eq.s32.totalorder %s30, 0
      %p178 = por %p176, %p177
      %p179 = scmp.ne.s32.totalorder %s165, %s166
      %p180 = scmp.eq.s32.totalorder %s31, 1
      %p181 = por %p179, %p180
      %p183 = scmp.ne.s32.totalorder %s166, %s182
      %p184 = scmp.eq.s32.totalorder %s31, 0
      %p185 = por %p183, %p184
      %s187 = sadd.s32 %s186, 1
      %p190 = scmp.eq.s32.totalorder %s25, 1
      %p191 = scmp.ne.s32.totalorder %s186, %s188
      %p192 = scmp.eq.s32.totalorder %s25, 0
      %p193 = por %p191, %p192
      %p194 = scmp.ne.s32.totalorder %s186, %s188
      %p195 = scmp.eq.s32.totalorder %s30, 1
      %p196 = por %p194, %p195
      %p197 = scmp.ne.s32.totalorder %s188, %s189
      %p198 = scmp.eq.s32.totalorder %s30, 0
      %p199 = por %p197, %p198
      %p200 = scmp.ne.s32.totalorder %s188, %s189
      %p201 = scmp.eq.s32.totalorder %s31, 1
      %p202 = por %p200, %p201
      %p204 = scmp.ne.s32.totalorder %s189, %s203
      %p205 = scmp.eq.s32.totalorder %s31, 0
      %p206 = por %p204, %p205
      %s208 = sadd.s32 %s207, 1
      %p211 = scmp.eq.s32.totalorder %s25, 1
      %p212 = scmp.ne.s32.totalorder %s207, %s209
      %p213 = scmp.eq.s32.totalorder %s25, 0
      %p214 = por %p212, %p213
      %p215 = scmp.ne.s32.totalorder %s207, %s209
      %p216 = scmp.eq.s32.totalorder %s30, 1
      %p217 = por %p215, %p216
      %p218 = scmp.ne.s32.totalorder %s209, %s210
      %p219 = scmp.eq.s32.totalorder %s30, 0
      %p220 = por %p218, %p219
      %p221 = scmp.ne.s32.totalorder %s209, %s210
      %p222 = scmp.eq.s32.totalorder %s31, 1
      %p223 = por %p221, %p222
      %p225 = scmp.ne.s32.totalorder %s210, %s224
      %p226 = scmp.eq.s32.totalorder %s31, 0
      %p227 = por %p225, %p226
      %s229 = sadd.s32 %s228, 1
      %p232 = scmp.eq.s32.totalorder %s25, 1
      %p233 = scmp.ne.s32.totalorder %s228, %s230
      %p234 = scmp.eq.s32.totalorder %s25, 0
      %p235 = por %p233, %p234
      %p236 = scmp.ne.s32.totalorder %s228, %s230
      %p237 = scmp.eq.s32.totalorder %s30, 1
      %p238 = por %p236, %p237
      %p239 = scmp.ne.s32.totalorder %s230, %s231
      %p240 = scmp.eq.s32.totalorder %s30, 0
      %p241 = por %p239, %p240
      %p242 = scmp.ne.s32.totalorder %s230, %s231
      %p243 = scmp.eq.s32.totalorder %s31, 1
      %p244 = por %p242, %p243
      %p246 = scmp.ne.s32.totalorder %s231, %s245
      %p247 = scmp.eq.s32.totalorder %s31, 0
      %p248 = por %p246, %p247
      %s250 = sadd.s32 %s249, 1
      %p253 = scmp.eq.s32.totalorder %s25, 1
      %p254 = scmp.ne.s32.totalorder %s249, %s251
      %p255 = scmp.eq.s32.totalorder %s25, 0
      %p256 = por %p254, %p255
      %p257 = scmp.ne.s32.totalorder %s249, %s251
      %p258 = scmp.eq.s32.totalorder %s30, 1
      %p259 = por %p257, %p258
      %p260 = scmp.ne.s32.totalorder %s251, %s252
      %p261 = scmp.eq.s32.totalorder %s30, 0
      %p262 = por %p260, %p261
      %p263 = scmp.ne.s32.totalorder %s251, %s252
      %p264 = scmp.eq.s32.totalorder %s31, 1
      %p265 = por %p263, %p264
      %p267 = scmp.ne.s32.totalorder %s252, %s266
      %p268 = scmp.eq.s32.totalorder %s31, 0
      %p269 = por %p267, %p268
      %s271 = sadd.s32 %s270, 1
      %p274 = scmp.eq.s32.totalorder %s25, 1
      %p275 = scmp.ne.s32.totalorder %s270, %s272
      %p276 = scmp.eq.s32.totalorder %s25, 0
      %p277 = por %p275, %p276
      %p278 = scmp.ne.s32.totalorder %s270, %s272
      %p279 = scmp.eq.s32.totalorder %s30, 1
      %p280 = por %p278, %p279
      %p281 = scmp.ne.s32.totalorder %s272, %s273
      %p282 = scmp.eq.s32.totalorder %s30, 0
      %p283 = por %p281, %p282
      %p284 = scmp.ne.s32.totalorder %s272, %s273
      %p285 = scmp.eq.s32.totalorder %s31, 1
      %p286 = por %p284, %p285
      %p288 = scmp.ne.s32.totalorder %s273, %s287
      %p289 = scmp.eq.s32.totalorder %s31, 0
      %p290 = por %p288, %p289
      %s291 = ssub.s32 %s32, %s44
      %p292 = scmp.eq.s32.totalorder %s291, 0
      %s294 = sadd.s32 %s293, 1
      %s295 = scalar_select %p292, %s293, %s294
      %p298 = pneg %p292
      %p299 = scmp.eq.s32.totalorder %s25, 1
      %p300 = por %p298, %p299
      %p301 = scmp.ne.s32.totalorder %s293, %s296
      %p302 = scmp.eq.s32.totalorder %s25, 0
      %p303 = por %p301, %p302
      %p304 = scmp.ne.s32.totalorder %s293, %s296
      %p305 = scmp.eq.s32.totalorder %s30, 1
      %p306 = por %p304, %p305
      %p307 = scmp.ne.s32.totalorder %s296, %s297
      %p308 = scmp.eq.s32.totalorder %s30, 0
      %p309 = por %p307, %p308
      %p310 = scmp.ne.s32.totalorder %s296, %s297
      %p311 = scmp.eq.s32.totalorder %s31, 1
      %p312 = por %p310, %p311
      %p314 = scmp.ne.s32.totalorder %s297, %s313
      %p315 = scmp.eq.s32.totalorder %s31, 0
      %p316 = por %p314, %p315
      %p317 = scmp.le.s32.totalorder 1, %s25
      %p318 = scmp.lt.s32.totalorder %s25, 3
      %p319 = pnand %p317, %p318
      %p320 = pneg %p319
      // Predicated region
      $region9: #{tpu_custom_call.1} parent=5 // pred_check
        _
      $region10: #{tpu_custom_call.1} parent=5 // pred_check_branch
        %322 = sbr.rel (%p319) target = $region12
      $region11: #{tpu_custom_call.1} parent=5 // pred_region
        %s323 = ssub.s32 %s25, 1
        // Predicated region
        $region13: #{tpu_custom_call.1} parent=11 // pred_check
          %p324 = pneg %p84
        $region14: #{tpu_custom_call.1} parent=11 // pred_check_branch
          %326 = sbr.rel (%p324) target = $region16
        $region15: #{tpu_custom_call.1} parent=11 // pred_region
          %s328 = ssub.s32 16, 16
          %329 = vsyncadd [#allocation10], %s328
          %s331 = sshll.u32 [#allocation9], 4
          %s332 = int_to_ptr.vmem [resolvable:$true] %s331
          %334 = dma.hbm_to_vmem [thread:$0]  %s1, 16, %s332, [#allocation10]
        $region16: #{tpu_custom_call.1} parent=11 // pred_fallthru
          _
        // Predicated region
        $region17: #{tpu_custom_call.1} parent=11 // pred_check
          %p335 = pneg %p105
        $region18: #{tpu_custom_call.1} parent=11 // pred_check_branch
          %337 = sbr.rel (%p335) target = $region20
        $region19: #{tpu_custom_call.1} parent=11 // pred_region
          %s339 = ssub.s32 128, 128
          %340 = vsyncadd [#allocation10], %s339
          %s341 = sshll.u32 [#allocation11], 4
          %s342 = int_to_ptr.vmem [resolvable:$true] %s341
          %347 = dma.hbm_to_vmem [thread:$0]  %s2, 128, %s342, [#allocation10], 64, 64, 4
        $region20: #{tpu_custom_call.1} parent=11 // pred_fallthru
          _
        // Predicated region
        $region21: #{tpu_custom_call.1} parent=11 // pred_check
          %p348 = pneg %p126
        $region22: #{tpu_custom_call.1} parent=11 // pred_check_branch
          %350 = sbr.rel (%p348) target = $region24
        $region23: #{tpu_custom_call.1} parent=11 // pred_region
          _
        $region24: #{tpu_custom_call.1} parent=11 // pred_fallthru
          _
        // Predicated region
        $region25: #{tpu_custom_call.1} parent=11 // pred_check
          %p351 = pneg %p152
        $region26: #{tpu_custom_call.1} parent=11 // pred_check_branch
          %353 = sbr.rel (%p351) target = $region28
        $region27: #{tpu_custom_call.1} parent=11 // pred_region
          %s355 = ssub.s32 1024, 1024
          %356 = vsyncadd [#allocation13], %s355
          %s357 = smul.addr %s35, 64
          %s358 = scalar_lea.hbm %s4, %s357
          %s359 = sshll.u32 [#allocation12], 4
          %s360 = int_to_ptr.vmem [resolvable:$true] %s359
          %365 = dma.hbm_to_vmem [thread:$0]  %s358, 1024, %s360, [#allocation13], 64, 64, 4
        $region28: #{tpu_custom_call.1} parent=11 // pred_fallthru
          _
        // Predicated region
        $region29: #{tpu_custom_call.1} parent=11 // pred_check
          %p366 = pneg %p178
        $region30: #{tpu_custom_call.1} parent=11 // pred_check_branch
          %368 = sbr.rel (%p366) target = $region32
        $region31: #{tpu_custom_call.1} parent=11 // pred_region
          %p369 = scmp.lt.s32.totalorder %s35, 0
          %s370 = scalar_select %p369, %s35, 0
          %s371 = scalar_lea.vmem %s5, %s370
        $region32: #{tpu_custom_call.1} parent=11 // pred_fallthru
          _
        // Predicated region
        $region33: #{tpu_custom_call.1} parent=11 // pred_check
          %p372 = pneg %p199
        $region34: #{tpu_custom_call.1} parent=11 // pred_check_branch
          %374 = sbr.rel (%p372) target = $region36
        $region35: #{tpu_custom_call.1} parent=11 // pred_region
          _
        $region36: #{tpu_custom_call.1} parent=11 // pred_fallthru
          _
        // Predicated region
        $region37: #{tpu_custom_call.1} parent=11 // pred_check
          %p375 = pneg %p220
        $region38: #{tpu_custom_call.1} parent=11 // pred_check_branch
          %377 = sbr.rel (%p375) target = $region40
        $region39: #{tpu_custom_call.1} parent=11 // pred_region
          _
        $region40: #{tpu_custom_call.1} parent=11 // pred_fallthru
          _
        // Predicated region
        $region41: #{tpu_custom_call.1} parent=11 // pred_check
          %p378 = pneg %p241
        $region42: #{tpu_custom_call.1} parent=11 // pred_check_branch
          %380 = sbr.rel (%p378) target = $region44
        $region43: #{tpu_custom_call.1} parent=11 // pred_region
          _
        $region44: #{tpu_custom_call.1} parent=11 // pred_fallthru
          _
        // Predicated region
        $region45: #{tpu_custom_call.1} parent=11 // pred_check
          %p381 = pneg %p262
        $region46: #{tpu_custom_call.1} parent=11 // pred_check_branch
          %383 = sbr.rel (%p381) target = $region48
        $region47: #{tpu_custom_call.1} parent=11 // pred_region
          _
        $region48: #{tpu_custom_call.1} parent=11 // pred_fallthru
          _
        // Predicated region
        $region49: #{tpu_custom_call.1} parent=11 // pred_check
          %p384 = pneg %p283
        $region50: #{tpu_custom_call.1} parent=11 // pred_check_branch
          %386 = sbr.rel (%p384) target = $region52
        $region51: #{tpu_custom_call.1} parent=11 // pred_region
          _
        $region52: #{tpu_custom_call.1} parent=11 // pred_fallthru
          _
      $region12: #{tpu_custom_call.1} parent=5 // pred_fallthru
        _
      %p387 = scmp.lt.s32.totalorder %s25, 2
      // Predicated region
      $region53: #{tpu_custom_call.1} parent=5 // pred_check
        %p388 = pneg %p387
      $region54: #{tpu_custom_call.1} parent=5 // pred_check_branch
        %390 = sbr.rel (%p388) target = $region56
      $region55: #{tpu_custom_call.1} parent=5 // pred_region
        // Predicated region
        $region57: #{tpu_custom_call.1} parent=55 // pred_check
          %p391 = pneg %p57
        $region58: #{tpu_custom_call.1} parent=55 // pred_check_branch
          %393 = sbr.rel (%p391) target = $region60
        $region59: #{tpu_custom_call.1} parent=55 // pred_region
          %s394 = sand.u32 %s47, 1
          %s395 = scalar_lea.sflag [#allocation7], %s394
          %s396 = sand.u32 %s47, 1
          %s397 = smul.addr %s396, 4
          %s398 = scalar_lea.vmem [#allocation6], %s397
          %s400 = ssub.s32 64, 64
          %401 = vsyncadd %s395, %s400
          %s402 = smul.addr %s32, 2
          %s403 = smul.addr %s402, 32
          %s404 = scalar_lea.hbm %s0, %s403
          %s406 = sshll.u32 %s398, 4
          %s407 = int_to_ptr.vmem [resolvable:$true] %s406
          %409 = dma.hbm_to_vmem [thread:$0]  %s404, 64, %s407, %s395
        $region60: #{tpu_custom_call.1} parent=55 // pred_fallthru
          _
      $region56: #{tpu_custom_call.1} parent=5 // pred_fallthru
        _
      %p410 = scmp.le.s32.totalorder 1, %s25
      %p411 = scmp.lt.s32.totalorder %s25, 3
      %p412 = pnand %p410, %p411
      %p413 = pneg %p412
      // Predicated region
      $region61: #{tpu_custom_call.1} parent=5 // pred_check
        _
      $region62: #{tpu_custom_call.1} parent=5 // pred_check_branch
        %415 = sbr.rel (%p412) target = $region64
      $region63: #{tpu_custom_call.1} parent=5 // pred_region
        %s416 = ssub.s32 %s25, 1
        %s417 = sand.u32 %s50, 1
        %s418 = scalar_lea.sflag [#allocation7], %s417
        %s419 = sand.u32 %s50, 1
        %s420 = smul.addr %s419, 4
        %s421 = scalar_lea.vmem [#allocation6], %s420
        // Predicated region
        $region65: #{tpu_custom_call.1} parent=63 // pred_check
          %p422 = pneg %p63
        $region66: #{tpu_custom_call.1} parent=63 // pred_check_branch
          %424 = sbr.rel (%p422) target = $region68
        $region67: #{tpu_custom_call.1} parent=63 // pred_region
          %425 = dma.done %s418, 64
        $region68: #{tpu_custom_call.1} parent=63 // pred_fallthru
          _
        // Predicated region
        $region69: #{tpu_custom_call.1} parent=63 // pred_check
          %p426 = pneg %p84
        $region70: #{tpu_custom_call.1} parent=63 // pred_check_branch
          %428 = sbr.rel (%p426) target = $region72
        $region71: #{tpu_custom_call.1} parent=63 // pred_region
          %429 = dma.done [#allocation10], 16
        $region72: #{tpu_custom_call.1} parent=63 // pred_fallthru
          _
        // Predicated region
        $region73: #{tpu_custom_call.1} parent=63 // pred_check
          %p430 = pneg %p105
        $region74: #{tpu_custom_call.1} parent=63 // pred_check_branch
          %432 = sbr.rel (%p430) target = $region76
        $region75: #{tpu_custom_call.1} parent=63 // pred_region
          %433 = dma.done [#allocation10], 128
        $region76: #{tpu_custom_call.1} parent=63 // pred_fallthru
          _
        // Predicated region
        $region77: #{tpu_custom_call.1} parent=63 // pred_check
          %p434 = pneg %p152
        $region78: #{tpu_custom_call.1} parent=63 // pred_check_branch
          %436 = sbr.rel (%p434) target = $region80
        $region79: #{tpu_custom_call.1} parent=63 // pred_region
          %437 = dma.done [#allocation13], 1024
        $region80: #{tpu_custom_call.1} parent=63 // pred_fallthru
          _
        %s438 = sand.u32 %s50, 1
        %s439 = scalar_lea.sflag [#allocation7], %s438
        %s440 = sand.u32 %s50, 1
        %s441 = smul.addr %s440, 4
        %s442 = scalar_lea.vmem [#allocation6], %s441
        %p443 = pneg %p63
        %p444 = pneg %p60
        %p445 = pneg %p84
        %p446 = pneg %p81
        %p447 = pneg %p105
        %p448 = pneg %p102
        %p449 = pneg %p126
        %p450 = pneg %p123
        %p451 = pneg %p152
        %p452 = pneg %p149
        %p453 = scmp.lt.s32.totalorder %s35, 0
        %s454 = scalar_select %p453, %s35, 0
        %s455 = scalar_lea.vmem %s5, %s454
        %p456 = pneg %p178
        %p457 = pneg %p175
        %p458 = pneg %p199
        %p459 = pneg %p196
        %p460 = pneg %p220
        %p461 = pneg %p217
        %p462 = pneg %p241
        %p463 = pneg %p238
        %p464 = pneg %p262
        %p465 = pneg %p259
        %p466 = pneg %p283
        %p467 = pneg %p280
        %p468 = pneg %p309
        %p469 = pneg %p306
        %s470 = sand.u32 %s296, 1
        %s471 = scalar_lea.sflag [#allocation8], %s470
        %s472 = sand.u32 %s296, 1
        %s473 = scalar_lea.vmem [#allocation14], %s472
        %p474 = scmp.lt.s32.totalorder %s35, 0
        %s475 = scalar_select %p474, %s35, 0
        %s476 = scalar_lea.vmem %s5, %s475
        %p478 = scmp.eq.s32.totalorder %s35, 0
        // Predicated region
        $region81: #{tpu_custom_call.1} parent=63 // pred_check
          %p479 = pneg %p478
        $region82: #{tpu_custom_call.1} parent=63 // pred_check_branch
          %481 = sbr.rel (%p479) target = $region84
        $region83: #{tpu_custom_call.1} parent=63 // pred_region
          %v482 = vld [vmem:[%s421] sm:$0x3]
          %v483 = vunpack.c.l.bf16 %v482
          %484 = vst [vmem:[#allocation2] sm:$0xf] %v483
          %v485 = vld [vmem:[%s421] sm:$0xf]
          %v486 = vunpack.c.l.bf16 %v485
          %v488 = vcombine.high %v486, %v486
          %489 = vrot.lane.b32.xlu0 %v486, 127
          %v490 = vpop.permute.xlu0 %489
          %491 = vrot.lane.b32.xlu0 %v488, 127
          %v492 = vpop.permute.xlu0 %491
          %vm493 = vcmask 1039360
          %v494 = vsel %vm493, %v490, %v492
          %496 = vst [vmem:[#allocation2 + $0x4] sm:$0xf] %v494
          %v497 = vld [vmem:[%s421] sm:$0xf]
          %v498 = vunpack.c.l.bf16 %v497
          %v500 = vcombine.high %v498, %v498
          %501 = vrot.lane.b32.xlu0 %v498, 126
          %v502 = vpop.permute.xlu0 %501
          %503 = vrot.lane.b32.xlu0 %v500, 126
          %v504 = vpop.permute.xlu0 %503
          %vm505 = vcmask 1031168
          %v506 = vsel %vm505, %v502, %v504
          %508 = vst [vmem:[#allocation2 + $0x8] sm:$0xf] %v506
          %v509 = vld [vmem:[#allocation11] sm:$0xf]
          %v510 = vld [vmem:[#allocation11 + $0x4] sm:$0xf]
          %v511 = vld [vmem:[#allocation2] sm:$0xff]
          %v512 = vld [vmem:[#allocation2 + $0x8] sm:$0xf]
          %v513 = vpack.c.bf16 %v512, %v511
          %v514 = vld [vmem:[%s3] sm:$0xff]
          %v515 = vld [vmem:[%s3 + $0x8] sm:$0xff]
          %517 = vset.pattern.permute.xlu0 0
          %518 = vperm.xlu0 %517, %v514
          %v519 = vpop.permute.xlu0 %518
          %522 = vset.pattern.permute.xlu0 0
          %523 = vperm.xlu0 %522, %v515
          %v524 = vpop.permute.xlu0 %523
          %v528 = vunpack.c.l.b16 %v509
          %v529 = vunpack.c.l.b16 %v510
          %v530 = vpack.c.b16 %v529, %v528
          %vm531 = vcmask 97280
          %v533 = vsel %vm531, %v530, 0
          %vm535 = vcmask 1045504
          %v537 = vsel %vm535, %v513, 0
          %539 = vmatprep.subr.bf16.mxu0 0
          %540 = vmatpush1.bf16.msra.mxu0 %v537
          %541 = vmatprep.subr.bf16.mxu0 0
          %542 = vmatpush1.bf16.msra.mxu0 0
          %543 = vmatprep.subr.bf16.mxu0 0
          %544 = vmatpush1.bf16.msra.mxu0 0
          %545 = vmatprep.subr.bf16.mxu0 0
          %546 = vmatpush1.bf16.msra.mxu0 0
          %547 = vmatprep.subr.bf16.mxu0 0
          %548 = vmatpush1.bf16.msra.mxu0 0
          %549 = vmatprep.subr.bf16.mxu0 0
          %550 = vmatpush1.bf16.msra.mxu0 0
          %551 = vmatprep.subr.bf16.mxu0 0
          %552 = vmatpush1.bf16.msra.mxu0 0
          %553 = vmatprep.subr.bf16.mxu0 0
          %554 = vmatpush1.bf16.msra.mxu0 0
          %555 = vmatprep.subr.bf16.mxu0 0
          %556 = vmatpush1.bf16.msra.mxu0 0
          %557 = vmatprep.subr.bf16.mxu0 0
          %558 = vmatpush1.bf16.msra.mxu0 0
          %559 = vmatprep.subr.bf16.mxu0 0
          %560 = vmatpush1.bf16.msra.mxu0 0
          %561 = vmatprep.subr.bf16.mxu0 0
          %562 = vmatpush1.bf16.msra.mxu0 0
          %563 = vmatprep.subr.bf16.mxu0 0
          %564 = vmatpush1.bf16.msra.mxu0 0
          %565 = vmatprep.subr.bf16.mxu0 0
          %566 = vmatpush1.bf16.msra.mxu0 0
          %567 = vmatprep.subr.bf16.mxu0 0
          %568 = vmatpush1.bf16.msra.mxu0 0
          %569 = vmatprep.subr.bf16.mxu0 0
          %570 = vmatpush1.bf16.msra.mxu0 0
          %571 = vmatprep.mubr.bf16.mxu0 0
          %572 = vmatmul.mubr.bf16.gmra.mrb[0].mxu0 %v533
          %v573 = vpop.f32.mrb[0].mxu0
          %v574 = vadd.f32 %v519, %v573
          %v575 = vpop.f32.mrb[0].mxu0
          %v576 = vpop.f32.mrb[0].mxu0
          %v577 = vadd.f32 %v524, %v576
          %v578 = vpop.f32.mrb[0].mxu0
          %579 = vdwg.mxu0
          %v580 = vmax.f32 %v574, 0.0
          %v581 = vmax.f32 %v577, 0.0
          %v582 = vld [vmem:[#allocation9] sm:$0x1]
          %v584 = vlaneseq
          %v585 = vshrl.u32 %v584, 7
          %v586 = vsub.s32 0, %v585
          %v587 = vrot.slane %v582, %v586
          %v589 = vmul.f32 %v580, %v587
          %v590 = vmul.f32 %v581, %v587
          %591 = vst [vmem:[#allocation3] sm:$0xff] %v589
          %592 = vst [vmem:[#allocation3 + $0x8] sm:$0xff] %v590
          %v593 = vpack.c.bf16 %v590, %v589
          %594 = vst [vmem:[#allocation4] sm:$0xff] %v593
          %vm595 = vcmask 7168
          %596 = vst.msk [vmem:[#allocation5] sm:$0xff] %vm595, 0.0
          %597 = vst.msk [vmem:[#allocation5 + $0x8] sm:$0xff] %vm595, 0.0
        $region84: #{tpu_custom_call.1} parent=63 // pred_fallthru
          _
        %v598 = vld [vmem:[#allocation4] sm:$0xff]
        %v599 = vld [vmem:[#allocation12] sm:$0xf]
        %v600 = vld [vmem:[#allocation12 + $0x4] sm:$0xf]
        %v601 = vld [vmem:[#allocation12 + $0x8] sm:$0xf]
        %v602 = vld [vmem:[#allocation12 + $0xc] sm:$0xf]
        %v603 = vld [vmem:[#allocation12 + $0x10] sm:$0xf]
        %v604 = vld [vmem:[#allocation12 + $0x14] sm:$0xf]
        %v605 = vld [vmem:[#allocation12 + $0x18] sm:$0xf]
        %v606 = vld [vmem:[#allocation12 + $0x1c] sm:$0xf]
        %v607 = vld [vmem:[#allocation12 + $0x20] sm:$0xf]
        %v608 = vld [vmem:[#allocation12 + $0x24] sm:$0xf]
        %v609 = vld [vmem:[#allocation12 + $0x28] sm:$0xf]
        %v610 = vld [vmem:[#allocation12 + $0x2c] sm:$0xf]
        %v611 = vld [vmem:[#allocation12 + $0x30] sm:$0xf]
        %v612 = vld [vmem:[#allocation12 + $0x34] sm:$0xf]
        %v613 = vld [vmem:[#allocation12 + $0x38] sm:$0xf]
        %v614 = vld [vmem:[#allocation12 + $0x3c] sm:$0xf]
        %v615 = vld [vmem:[%s476] sm:$0x1]
        %v617 = vlaneseq
        %v618 = vshrl.u32 %v617, 7
        %v619 = vsub.s32 0, %v618
        %v620 = vrot.slane %v615, %v619
        %v638 = vunpack.c.l.b16 %v599
        %v639 = vunpack.c.l.b16 %v600
        %v640 = vunpack.c.l.b16 %v601
        %v641 = vunpack.c.l.b16 %v602
        %v642 = vunpack.c.l.b16 %v603
        %v643 = vunpack.c.l.b16 %v604
        %v644 = vunpack.c.l.b16 %v605
        %v645 = vunpack.c.l.b16 %v606
        %v646 = vunpack.c.l.b16 %v607
        %v647 = vunpack.c.l.b16 %v608
        %v648 = vunpack.c.l.b16 %v609
        %v649 = vunpack.c.l.b16 %v610
        %v650 = vunpack.c.l.b16 %v611
        %v651 = vunpack.c.l.b16 %v612
        %v652 = vunpack.c.l.b16 %v613
        %v653 = vunpack.c.l.b16 %v614
        %v654 = vpack.c.b16 %v639, %v638
        %v655 = vpack.c.b16 %v641, %v640
        %v656 = vpack.c.b16 %v643, %v642
        %v657 = vpack.c.b16 %v645, %v644
        %v658 = vpack.c.b16 %v647, %v646
        %v659 = vpack.c.b16 %v649, %v648
        %v660 = vpack.c.b16 %v651, %v650
        %v661 = vpack.c.b16 %v653, %v652
        %670 = vmatprep.subr.bf16.mxu0 0
        %671 = vmatpush1.bf16.msra.mxu0 %v654
        %672 = vmatprep.subr.bf16.mxu0 0
        %673 = vmatpush1.bf16.msra.mxu0 %v655
        %674 = vmatprep.subr.bf16.mxu0 0
        %675 = vmatpush1.bf16.msra.mxu0 %v656
        %676 = vmatprep.subr.bf16.mxu0 0
        %677 = vmatpush1.bf16.msra.mxu0 %v657
        %678 = vmatprep.subr.bf16.mxu0 0
        %679 = vmatpush1.bf16.msra.mxu0 %v658
        %680 = vmatprep.subr.bf16.mxu0 0
        %681 = vmatpush1.bf16.msra.mxu0 %v659
        %682 = vmatprep.subr.bf16.mxu0 0
        %683 = vmatpush1.bf16.msra.mxu0 %v660
        %684 = vmatprep.subr.bf16.mxu0 0
        %685 = vmatpush1.bf16.msra.mxu0 %v661
        %686 = vmatprep.subr.bf16.mxu0 0
        %687 = vmatpush1.bf16.msra.mxu0 0
        %688 = vmatprep.subr.bf16.mxu0 0
        %689 = vmatpush1.bf16.msra.mxu0 0
        %690 = vmatprep.subr.bf16.mxu0 0
        %691 = vmatpush1.bf16.msra.mxu0 0
        %692 = vmatprep.subr.bf16.mxu0 0
        %693 = vmatpush1.bf16.msra.mxu0 0
        %694 = vmatprep.subr.bf16.mxu0 0
        %695 = vmatpush1.bf16.msra.mxu0 0
        %696 = vmatprep.subr.bf16.mxu0 0
        %697 = vmatpush1.bf16.msra.mxu0 0
        %698 = vmatprep.subr.bf16.mxu0 0
        %699 = vmatpush1.bf16.msra.mxu0 0
        %700 = vmatprep.subr.bf16.mxu0 0
        %701 = vmatpush1.bf16.msra.mxu0 0
        %702 = vmatprep.mubr.bf16.mxu0 0
        %703 = vmatmul.mubr.bf16.gmra.mrb[0].mxu0 %v598
        %v704 = vpop.f32.mrb[0].mxu0
        %v705 = vadd.f32 %v620, %v704
        %v706 = vpop.f32.mrb[0].mxu0
        %v707 = vpop.f32.mrb[0].mxu0
        %v708 = vadd.f32 %v620, %v707
        %v709 = vpop.f32.mrb[0].mxu0
        %710 = vdwg.mxu0
        %v711 = vtanh.pop %v705
        %v712 = vtanh.pop %v708
        %v713 = vmax.f32 %v711, %v712
        %v714 = vrot.slane %v713, 4
        %v715 = vmax.f32 %v713, %v714
        %v716 = vrot.slane %v715, 2
        %v717 = vmax.f32 %v715, %v716
        %v718 = vrot.slane %v717, 1
        %v719 = vmax.f32 %v717, %v718
        %v720 = vsub.f32 %v711, %v719
        %v721 = vsub.f32 %v712, %v719
        %v722 = vmul.f32 %v720, 1.442695
        %v723 = vpow.pop %v722
        %v724 = vmul.f32 %v721, 1.442695
        %v725 = vpow.pop %v724
        %v726 = vadd.f32 %v723, %v725
        %v727 = vrot.slane %v726, 4
        %v728 = vadd.f32 %v726, %v727
        %v729 = vrot.slane %v728, 2
        %v730 = vadd.f32 %v728, %v729
        %v731 = vrot.slane %v730, 1
        %v732 = vadd.f32 %v730, %v731
        %v733 = vrcp.pop %v732
        %v734 = vmul.f32 %v723, %v733
        %v735 = vmul.f32 %v725, %v733
        %s736 = smul.u32 %s35, 128
        %s737 = sshra.s32 %s736, 7
        %s738 = sand.u32 %s736, 127
        %s739 = scalar_lea.vmem [#allocation3], %s737
        %v740 = vld [vmem:[%s739] sm:$0xff]
        %v741 = vld [vmem:[%s739 + $0x8] sm:$0xff]
        %v742 = vmul.f32 %v734, %v740
        %v743 = vmul.f32 %v735, %v741
        %v744 = vld [vmem:[#allocation5] sm:$0xff]
        %v745 = vld [vmem:[#allocation5 + $0x8] sm:$0xff]
        %746 = vadd.xlane.f32.xlu0 %v742
        %v747 = vpop.xlane.xlu0 %746
        %748 = vadd.xlane.f32.xlu0 %v743
        %v749 = vpop.xlane.xlu0 %748
        %v750 = vadd.f32 %v744, %v747
        %v751 = vadd.f32 %v745, %v749
        %vm752 = vcmask 7168
        %753 = vst.msk [vmem:[#allocation5] sm:$0xff] %vm752, %v750
        %754 = vst.msk [vmem:[#allocation5 + $0x8] sm:$0xff] %vm752, %v751
        // Predicated region
        $region85: #{tpu_custom_call.1} parent=63 // pred_check
          %p755 = pneg %p478
        $region86: #{tpu_custom_call.1} parent=63 // pred_check_branch
          %757 = sbr.rel (%p755) target = $region88
        $region87: #{tpu_custom_call.1} parent=63 // pred_region
          %v758 = vld [vmem:[#allocation5] sm:$0xff]
          %v759 = vld [vmem:[#allocation5 + $0x8] sm:$0xff]
          %v760 = vld [vmem:[#allocation3] sm:$0xff]
          %v761 = vld [vmem:[#allocation3 + $0x8] sm:$0xff]
          %762 = vadd.xlane.f32.xlu0 %v760
          %v763 = vpop.xlane.xlu0 %762
          %764 = vadd.xlane.f32.xlu0 %v761
          %v765 = vpop.xlane.xlu0 %764
          %v766 = vld [vmem:[%s6] sm:$0xff]
          %v767 = vld [vmem:[%s6 + $0x8] sm:$0xff]
          %769 = vset.pattern.permute.xlu0 0
          %770 = vperm.xlu0 %769, %v758
          %v771 = vpop.permute.xlu0 %770
          %774 = vset.pattern.permute.xlu0 0
          %775 = vperm.xlu0 %774, %v759
          %v776 = vpop.permute.xlu0 %775
          %v778 = vmul.f32 %v771, %v766
          %v779 = vmul.f32 %v776, %v767
          %vm780 = vcmask 130048
          %v781 = vsel %vm780, %v778, 0.0
          %v782 = vsel %vm780, %v779, 0.0
          %v783 = vadd.f32 %v781, %v782
          %v784 = vrot.slane %v783, 4
          %v785 = vadd.f32 %v783, %v784
          %v786 = vrot.slane %v785, 2
          %v787 = vadd.f32 %v785, %v786
          %v788 = vrot.slane %v787, 1
          %v789 = vadd.f32 %v787, %v788
          %v790 = vld [vmem:[%s7] sm:$0xff]
          %v791 = vld [vmem:[%s7 + $0x8] sm:$0xff]
          %v792 = vmul.f32 %v763, %v790
          %v793 = vmul.f32 %v765, %v791
          %v794 = vsel %vm780, %v792, 0.0
          %v795 = vsel %vm780, %v793, 0.0
          %v796 = vadd.f32 %v794, %v795
          %v797 = vrot.slane %v796, 4
          %v798 = vadd.f32 %v796, %v797
          %v799 = vrot.slane %v798, 2
          %v800 = vadd.f32 %v798, %v799
          %v801 = vrot.slane %v800, 1
          %v802 = vadd.f32 %v800, %v801
          %v803 = vadd.f32 %v789, %v802
          %v804 = vld [vmem:[%s8] sm:$0x1]
          %v805 = vadd.f32 %v803, %v804
          %v806 = vmax.f32 %v805, 0.0
          %v807 = vld [vmem:[%s9] sm:$0xff]
          %v808 = vld [vmem:[%s9 + $0x8] sm:$0xff]
          %v809 = vld [vmem:[%s10] sm:$0x1]
          %v811 = vsel %vm780, %v806, 0
          %813 = vmatprep.subr.mxu0 0.0
          %814 = vmatpush1.msra.mxu0 %v807
          %815 = vmatprep.subr.mxu0 0.0
          %816 = vmatpush1.msra.mxu0 %v808
          %817 = vmatprep.subr.mxu0 0.0
          %818 = vmatpush1.msra.mxu0 0.0
          %819 = vmatprep.subr.mxu0 0.0
          %820 = vmatpush1.msra.mxu0 0.0
          %821 = vmatprep.subr.mxu0 0.0
          %822 = vmatpush1.msra.mxu0 0.0
          %823 = vmatprep.subr.mxu0 0.0
          %824 = vmatpush1.msra.mxu0 0.0
          %825 = vmatprep.subr.mxu0 0.0
          %826 = vmatpush1.msra.mxu0 0.0
          %827 = vmatprep.subr.mxu0 0.0
          %828 = vmatpush1.msra.mxu0 0.0
          %829 = vmatprep.subr.mxu0 0.0
          %830 = vmatpush1.msra.mxu0 0.0
          %831 = vmatprep.subr.mxu0 0.0
          %832 = vmatpush1.msra.mxu0 0.0
          %833 = vmatprep.subr.mxu0 0.0
          %834 = vmatpush1.msra.mxu0 0.0
          %835 = vmatprep.subr.mxu0 0.0
          %836 = vmatpush1.msra.mxu0 0.0
          %837 = vmatprep.subr.mxu0 0.0
          %838 = vmatpush1.msra.mxu0 0.0
          %839 = vmatprep.subr.mxu0 0.0
          %840 = vmatpush1.msra.mxu0 0.0
          %841 = vmatprep.subr.mxu0 0.0
          %842 = vmatpush1.msra.mxu0 0.0
          %843 = vmatprep.subr.mxu0 0.0
          %844 = vmatpush1.msra.mxu0 0.0
          %845 = vmatprep.subr.mxu0 0.0
          %846 = vmatpush1.msra.mxu0 0.0
          %847 = vmatprep.subr.mxu0 0.0
          %848 = vmatpush1.msra.mxu0 0.0
          %849 = vmatprep.subr.mxu0 0.0
          %850 = vmatpush1.msra.mxu0 0.0
          %851 = vmatprep.subr.mxu0 0.0
          %852 = vmatpush1.msra.mxu0 0.0
          %853 = vmatprep.subr.mxu0 0.0
          %854 = vmatpush1.msra.mxu0 0.0
          %855 = vmatprep.subr.mxu0 0.0
          %856 = vmatpush1.msra.mxu0 0.0
          %857 = vmatprep.subr.mxu0 0.0
          %858 = vmatpush1.msra.mxu0 0.0
          %859 = vmatprep.subr.mxu0 0.0
          %860 = vmatpush1.msra.mxu0 0.0
          %861 = vmatprep.subr.mxu0 0.0
          %862 = vmatpush1.msra.mxu0 0.0
          %863 = vmatprep.subr.mxu0 0.0
          %864 = vmatpush1.msra.mxu0 0.0
          %865 = vmatprep.subr.mxu0 0.0
          %866 = vmatpush1.msra.mxu0 0.0
          %867 = vmatprep.subr.mxu0 0.0
          %868 = vmatpush1.msra.mxu0 0.0
          %869 = vmatprep.subr.mxu0 0.0
          %870 = vmatpush1.msra.mxu0 0.0
          %871 = vmatprep.subr.mxu0 0.0
          %872 = vmatpush1.msra.mxu0 0.0
          %873 = vmatprep.subr.mxu0 0.0
          %874 = vmatpush1.msra.mxu0 0.0
          %875 = vmatprep.subr.mxu0 0.0
          %876 = vmatpush1.msra.mxu0 0.0
          %877 = vmatprep.mubr.f32.mxu0 0.0
          %878 = vmatmul.mubr.f32.gmra.mrb[0].mxu0 %v811
          %v879 = vpop.f32.mrb[0].mxu0
          %v880 = vadd.f32 %v809, %v879
          %v881 = vpop.f32.mrb[0].mxu0
          %882 = vdwg.mxu0
          %vm883 = vcmask 401408
          %884 = vst.msk [vmem:[%s473] sm:$0x1] %vm883, %v880
        $region88: #{tpu_custom_call.1} parent=63 // pred_fallthru
          _
        %s885 = sand.u32 %s296, 1
        %s886 = scalar_lea.sflag [#allocation8], %s885
        %s887 = sand.u32 %s296, 1
        %s888 = scalar_lea.vmem [#allocation14], %s887
        // Predicated region
        $region89: #{tpu_custom_call.1} parent=63 // pred_check
          %p889 = pneg %p306
        $region90: #{tpu_custom_call.1} parent=63 // pred_check_branch
          %891 = sbr.rel (%p889) target = $region92
        $region91: #{tpu_custom_call.1} parent=63 // pred_region
          %s893 = ssub.s32 16, 16
          %894 = vsyncadd %s886, %s893
          %s895 = smul.addr %s34, 16
          %s896 = scalar_lea.hbm %s11, %s895
          %s898 = sshll.u32 %s888, 4
          %s899 = int_to_ptr.vmem [resolvable:$true] %s898
          %901 = dma.vmem_to_hbm [thread:$0]  %s899, 16, %s896, %s886
        $region92: #{tpu_custom_call.1} parent=63 // pred_fallthru
          _
      $region64: #{tpu_custom_call.1} parent=5 // pred_fallthru
        _
      %p902 = scmp.le.s32.totalorder 2, %s25
      // Predicated region
      $region93: #{tpu_custom_call.1} parent=5 // pred_check
        %p903 = pneg %p902
      $region94: #{tpu_custom_call.1} parent=5 // pred_check_branch
        %905 = sbr.rel (%p903) target = $region96
      $region95: #{tpu_custom_call.1} parent=5 // pred_region
        %s906 = ssub.s32 %s25, 2
        // Predicated region
        $region97: #{tpu_custom_call.1} parent=95 // pred_check
          %p907 = pneg %p312
        $region98: #{tpu_custom_call.1} parent=95 // pred_check_branch
          %909 = sbr.rel (%p907) target = $region100
        $region99: #{tpu_custom_call.1} parent=95 // pred_region
          %s910 = sand.u32 %s297, 1
          %s911 = scalar_lea.sflag [#allocation8], %s910
          %s912 = sand.u32 %s297, 1
          %s913 = scalar_lea.vmem [#allocation14], %s912
          %914 = dma.done %s911, 16
        $region100: #{tpu_custom_call.1} parent=95 // pred_fallthru
          _
      $region96: #{tpu_custom_call.1} parent=5 // pred_fallthru
        _
    $region6: #{tpu_custom_call.1} parent=1 // loop_footer
      %s29 = sadd.s32 1, %s25
    $region7: #{tpu_custom_call.1} parent=1 // loop_footer_branch
      %24 = sbr.rel target = $region3
    $region8: #{tpu_custom_call.1} parent=1 // loop_exit
      _
    %915 = vsyncpa [#allocation7], 1
    %s916 = scalar_lea.sflag [#allocation7], 1
    %917 = vsyncpa %s916, 1
    %918 = vsyncpa [#allocation10], 1
    %919 = vsyncpa [#allocation13], 1
    %920 = vsyncpa [#allocation8], 1
    %s921 = scalar_lea.sflag [#allocation8], 1
    %922 = vsyncpa %s921, 1

// kernel: tpu_custom_call.1
$region0: #{tpu_custom_call.1}
  #allocation0 [shape = 'u32[]', space=smem, size = 0x4, offset = 0x4, fixed_abs, tag = 'smem constant byte address 0x4 - core index']
  #allocation1 [shape = 'u32[144,128]{1,0:T(1,128)}', space=vmem, size = 0x12000, scoped, tag = 'internal scratch']
  #allocation2 [shape = 'f32[12,128]{1,0:T(8,128)}', space=vmem, size = 0x2000, scoped, tag = 'scratch operand']
  #allocation3 [shape = 'f32[16,128]{1,0:T(8,128)}', space=vmem, size = 0x2000, scoped, tag = 'scratch operand']
  #allocation4 [shape = 'bf16[16,128]{1,0:T(16,128)(2,1)}', space=vmem, size = 0x1000, scoped, tag = 'scratch operand']
  #allocation5 [shape = 'f32[16,1]{1,0:T(8,128)}', space=vmem, size = 0x2000, scoped, tag = 'scratch operand']
  %s0 = inlined_call_operand.hbm [shape: bf16[2,4,256], index: 0, kind: input, shape index: {}]
  %s1 = inlined_call_operand.hbm [shape: f32[1,128], index: 1, kind: input, shape index: {}]
  %s2 = inlined_call_operand.hbm [shape: bf16[16,12], index: 2, kind: input, shape index: {}]
  %s3 = inlined_call_operand.vmem [shape: f32[16,1], index: 3, kind: input, shape index: {}]
  %s4 = inlined_call_operand.hbm [shape: bf16[128,128], index: 4, kind: input, shape index: {}]
  %s5 = inlined_call_operand.vmem [shape: f32[1,128], index: 5, kind: input, shape index: {}]
  %s6 = inlined_call_operand.vmem [shape: f32[16,16], index: 6, kind: input, shape index: {}]
  %s7 = inlined_call_operand.vmem [shape: f32[16,16], index: 7, kind: input, shape index: {}]
  %s8 = inlined_call_operand.vmem [shape: f32[1,16], index: 8, kind: input, shape index: {}]
  %s9 = inlined_call_operand.vmem [shape: f32[16,50], index: 9, kind: input, shape index: {}]
  %s10 = inlined_call_operand.vmem [shape: f32[1,50], index: 10, kind: input, shape index: {}]
  %s11 = inlined_call_operand.hbm [shape: f32[2,1,50], index: 11, kind: output, shape index: {}]
  %s12 = sld [smem:[#allocation0]]
  $region101: #{tpu_custom_call.1} parent=0
    _
  %s14 = ssub.s32 1, %s12
  %s15 = scalar_select 0, %s14, %s12
  $region1: #{tpu_custom_call.1} parent=0
    #allocation6 [shape = 'u8[4096]{0}', space=vmem, size = 0x1000, scoped, tag = 'input window, operand 0']
    #allocation7 [shape = 's32[2]{0}', space=sflag, size = 0x8, scoped, tag = 'scoped memory for tpu_custom_call.1']
    #allocation8 [shape = 's32[2]{0}', space=sflag, size = 0x8, scoped, tag = 'scoped memory for tpu_custom_call.1']
    #allocation9 [shape = 'u8[512]{0}', space=vmem, size = 0x400, scoped, tag = 'input window, operand 1, single buffered']
    #allocation10 [shape = 's32[1]{0}', space=sflag, size = 0x4, scoped, tag = 'scoped memory for tpu_custom_call.1']
    #allocation11 [shape = 'u8[4096]{0}', space=vmem, size = 0x1000, scoped, tag = 'input window, operand 2, single buffered']
    #allocation12 [shape = 'u8[32768]{0}', space=vmem, size = 0x8000, scoped, tag = 'input window, operand 4, single buffered']
    #allocation13 [shape = 's32[1]{0}', space=sflag, size = 0x4, scoped, tag = 'scoped memory for tpu_custom_call.1']
    #allocation14 [shape = 'u8[1024]{0}', space=vmem, size = 0x400, scoped, tag = 'output window, operand 0']
    %16 = vsyncpa [#allocation7], 0
    %s17 = scalar_lea.sflag [#allocation7], 1
    %18 = vsyncpa %s17, 0
    %19 = vsyncpa [#allocation10], 0
    %20 = vsyncpa [#allocation13], 0
    %21 = vsyncpa [#allocation8], 0
    %s22 = scalar_lea.sflag [#allocation8], 1
    %23 = vsyncpa %s22, 0
    loop: start=0, step=1, limit=4
    $region2: #{tpu_custom_call.1} parent=1 // loop_pre_header
      _
    $region3: #{tpu_custom_call.1} parent=1 // loop_header
      %s25 = sphi 0, %s29
      %p26 = scmp.ge.s32.totalorder %s25, 4
      %s32 = sphi 0, %s44
      %s33 = sphi 0, %s40
      %s34 = sphi 0, %s32
      %s35 = sphi 0, %s33
      %s36 = sphi 0, %s34
      %s37 = sphi 0, %s35
      %s47 = sphi 0, %s49
      %s50 = sphi 0, %s47
      %s51 = sphi 0, %s50
      %s67 = sphi 0, %s51
      %s71 = sphi 0, %s71
      %s73 = sphi 0, %s71
      %s74 = sphi 0, %s73
      %s88 = sphi 0, %s74
      %s92 = sphi 0, %s92
      %s94 = sphi 0, %s92
      %s95 = sphi 0, %s94
      %s109 = sphi 0, %s95
      %s113 = sphi 0, %s113
      %s115 = sphi 0, %s113
      %s116 = sphi 0, %s115
      %s130 = sphi 0, %s116
      %s136 = sphi 0, %s138
      %s139 = sphi 0, %s136
      %s140 = sphi 0, %s139
      %s156 = sphi 0, %s140
      %s162 = sphi 0, %s164
      %s165 = sphi 0, %s162
      %s166 = sphi 0, %s165
      %s182 = sphi 0, %s166
      %s186 = sphi 0, %s186
      %s188 = sphi 0, %s186
      %s189 = sphi 0, %s188
      %s203 = sphi 0, %s189
      %s207 = sphi 0, %s207
      %s209 = sphi 0, %s207
      %s210 = sphi 0, %s209
      %s224 = sphi 0, %s210
      %s228 = sphi 0, %s228
      %s230 = sphi 0, %s228
      %s231 = sphi 0, %s230
      %s245 = sphi 0, %s231
      %s249 = sphi 0, %s249
      %s251 = sphi 0, %s249
      %s252 = sphi 0, %s251
      %s266 = sphi 0, %s252
      %s270 = sphi 0, %s270
      %s272 = sphi 0, %s270
      %s273 = sphi 0, %s272
      %s287 = sphi 0, %s273
      %s293 = sphi 0, %s295
      %s296 = sphi 0, %s293
      %s297 = sphi 0, %s296
      %s313 = sphi 0, %s297
    $region4: #{tpu_custom_call.1} parent=1 // loop_header_branch
      %28 = sbr.rel (%p26) target = $region8
    $region5: #{tpu_custom_call.1} parent=1 // loop_body
      %s30 = ssub.s32 %s25, 1
      %s31 = ssub.s32 %s25, 2
      %s38 = sadd.s32 1, %s33
      %p39 = scmp.ge.s32.totalorder %s38, 1
      %s40 = scalar_select %p39, 0, %s38
      %s41 = sadd.s32 1, %s32
      %s42 = scalar_select %p39, %s41, %s32
      %p43 = scmp.ge.s32.totalorder %s42, 2
      %s44 = scalar_select %p43, 0, %s42
      %s45 = ssub.s32 %s32, %s44
      %p46 = scmp.eq.s32.totalorder %s45, 0
      %s48 = sadd.s32 %s47, 1
      %s49 = scalar_select %p46, %s47, %s48
      %p52 = pneg %p46
      %p53 = scmp.eq.s32.totalorder %s25, 1
      %p54 = por %p52, %p53
      %p55 = scmp.ne.s32.totalorder %s47, %s50
      %p56 = scmp.eq.s32.totalorder %s25, 0
      %p57 = por %p55, %p56
      %p58 = scmp.ne.s32.totalorder %s47, %s50
      %p59 = scmp.eq.s32.totalorder %s30, 1
      %p60 = por %p58, %p59
      %p61 = scmp.ne.s32.totalorder %s50, %s51
      %p62 = scmp.eq.s32.totalorder %s30, 0
      %p63 = por %p61, %p62
      %p64 = scmp.ne.s32.totalorder %s50, %s51
      %p65 = scmp.eq.s32.totalorder %s31, 1
      %p66 = por %p64, %p65
      %p68 = scmp.ne.s32.totalorder %s51, %s67
      %p69 = scmp.eq.s32.totalorder %s31, 0
      %p70 = por %p68, %p69
      %s72 = sadd.s32 %s71, 1
      %p75 = scmp.eq.s32.totalorder %s25, 1
      %p76 = scmp.ne.s32.totalorder %s71, %s73
      %p77 = scmp.eq.s32.totalorder %s25, 0
      %p78 = por %p76, %p77
      %p79 = scmp.ne.s32.totalorder %s71, %s73
      %p80 = scmp.eq.s32.totalorder %s30, 1
      %p81 = por %p79, %p80
      %p82 = scmp.ne.s32.totalorder %s73, %s74
      %p83 = scmp.eq.s32.totalorder %s30, 0
      %p84 = por %p82, %p83
      %p85 = scmp.ne.s32.totalorder %s73, %s74
      %p86 = scmp.eq.s32.totalorder %s31, 1
      %p87 = por %p85, %p86
      %p89 = scmp.ne.s32.totalorder %s74, %s88
      %p90 = scmp.eq.s32.totalorder %s31, 0
      %p91 = por %p89, %p90
      %s93 = sadd.s32 %s92, 1
      %p96 = scmp.eq.s32.totalorder %s25, 1
      %p97 = scmp.ne.s32.totalorder %s92, %s94
      %p98 = scmp.eq.s32.totalorder %s25, 0
      %p99 = por %p97, %p98
      %p100 = scmp.ne.s32.totalorder %s92, %s94
      %p101 = scmp.eq.s32.totalorder %s30, 1
      %p102 = por %p100, %p101
      %p103 = scmp.ne.s32.totalorder %s94, %s95
      %p104 = scmp.eq.s32.totalorder %s30, 0
      %p105 = por %p103, %p104
      %p106 = scmp.ne.s32.totalorder %s94, %s95
      %p107 = scmp.eq.s32.totalorder %s31, 1
      %p108 = por %p106, %p107
      %p110 = scmp.ne.s32.totalorder %s95, %s109
      %p111 = scmp.eq.s32.totalorder %s31, 0
      %p112 = por %p110, %p111
      %s114 = sadd.s32 %s113, 1
      %p117 = scmp.eq.s32.totalorder %s25, 1
      %p118 = scmp.ne.s32.totalorder %s113, %s115
      %p119 = scmp.eq.s32.totalorder %s25, 0
      %p120 = por %p118, %p119
      %p121 = scmp.ne.s32.totalorder %s113, %s115
      %p122 = scmp.eq.s32.totalorder %s30, 1
      %p123 = por %p121, %p122
      %p124 = scmp.ne.s32.totalorder %s115, %s116
      %p125 = scmp.eq.s32.totalorder %s30, 0
      %p126 = por %p124, %p125
      %p127 = scmp.ne.s32.totalorder %s115, %s116
      %p128 = scmp.eq.s32.totalorder %s31, 1
      %p129 = por %p127, %p128
      %p131 = scmp.ne.s32.totalorder %s116, %s130
      %p132 = scmp.eq.s32.totalorder %s31, 0
      %p133 = por %p131, %p132
      %s134 = ssub.s32 %s33, %s40
      %p135 = scmp.eq.s32.totalorder %s134, 0
      %s137 = sadd.s32 %s136, 1
      %s138 = scalar_select %p135, %s136, %s137
      %p141 = pneg %p135
      %p142 = scmp.eq.s32.totalorder %s25, 1
      %p143 = por %p141, %p142
      %p144 = scmp.ne.s32.totalorder %s136, %s139
      %p145 = scmp.eq.s32.totalorder %s25, 0
      %p146 = por %p144, %p145
      %p147 = scmp.ne.s32.totalorder %s136, %s139
      %p148 = scmp.eq.s32.totalorder %s30, 1
      %p149 = por %p147, %p148
      %p150 = scmp.ne.s32.totalorder %s139, %s140
      %p151 = scmp.eq.s32.totalorder %s30, 0
      %p152 = por %p150, %p151
      %p153 = scmp.ne.s32.totalorder %s139, %s140
      %p154 = scmp.eq.s32.totalorder %s31, 1
      %p155 = por %p153, %p154
      %p157 = scmp.ne.s32.totalorder %s140, %s156
      %p158 = scmp.eq.s32.totalorder %s31, 0
      %p159 = por %p157, %p158
      %s160 = ssub.s32 %s33, %s40
      %p161 = scmp.eq.s32.totalorder %s160, 0
      %s163 = sadd.s32 %s162, 1
      %s164 = scalar_select %p161, %s162, %s163
      %p167 = pneg %p161
      %p168 = scmp.eq.s32.totalorder %s25, 1
      %p169 = por %p167, %p168
      %p170 = scmp.ne.s32.totalorder %s162, %s165
      %p171 = scmp.eq.s32.totalorder %s25, 0
      %p172 = por %p170, %p171
      %p173 = scmp.ne.s32.totalorder %s162, %s165
      %p174 = scmp.eq.s32.totalorder %s30, 1
      %p175 = por %p173, %p174
      %p176 = scmp.ne.s32.totalorder %s165, %s166
      %p177 = scmp.eq.s32.totalorder %s30, 0
      %p178 = por %p176, %p177
      %p179 = scmp.ne.s32.totalorder %s165, %s166
      %p180 = scmp.eq.s32.totalorder %s31, 1
      %p181 = por %p179, %p180
      %p183 = scmp.ne.s32.totalorder %s166, %s182
      %p184 = scmp.eq.s32.totalorder %s31, 0
      %p185 = por %p183, %p184
      %s187 = sadd.s32 %s186, 1
      %p190 = scmp.eq.s32.totalorder %s25, 1
      %p191 = scmp.ne.s32.totalorder %s186, %s188
      %p192 = scmp.eq.s32.totalorder %s25, 0
      %p193 = por %p191, %p192
      %p194 = scmp.ne.s32.totalorder %s186, %s188
      %p195 = scmp.eq.s32.totalorder %s30, 1
      %p196 = por %p194, %p195
      %p197 = scmp.ne.s32.totalorder %s188, %s189
      %p198 = scmp.eq.s32.totalorder %s30, 0
      %p199 = por %p197, %p198
      %p200 = scmp.ne.s32.totalorder %s188, %s189
      %p201 = scmp.eq.s32.totalorder %s31, 1
      %p202 = por %p200, %p201
      %p204 = scmp.ne.s32.totalorder %s189, %s203
      %p205 = scmp.eq.s32.totalorder %s31, 0
      %p206 = por %p204, %p205
      %s208 = sadd.s32 %s207, 1
      %p211 = scmp.eq.s32.totalorder %s25, 1
      %p212 = scmp.ne.s32.totalorder %s207, %s209
      %p213 = scmp.eq.s32.totalorder %s25, 0
      %p214 = por %p212, %p213
      %p215 = scmp.ne.s32.totalorder %s207, %s209
      %p216 = scmp.eq.s32.totalorder %s30, 1
      %p217 = por %p215, %p216
      %p218 = scmp.ne.s32.totalorder %s209, %s210
      %p219 = scmp.eq.s32.totalorder %s30, 0
      %p220 = por %p218, %p219
      %p221 = scmp.ne.s32.totalorder %s209, %s210
      %p222 = scmp.eq.s32.totalorder %s31, 1
      %p223 = por %p221, %p222
      %p225 = scmp.ne.s32.totalorder %s210, %s224
      %p226 = scmp.eq.s32.totalorder %s31, 0
      %p227 = por %p225, %p226
      %s229 = sadd.s32 %s228, 1
      %p232 = scmp.eq.s32.totalorder %s25, 1
      %p233 = scmp.ne.s32.totalorder %s228, %s230
      %p234 = scmp.eq.s32.totalorder %s25, 0
      %p235 = por %p233, %p234
      %p236 = scmp.ne.s32.totalorder %s228, %s230
      %p237 = scmp.eq.s32.totalorder %s30, 1
      %p238 = por %p236, %p237
      %p239 = scmp.ne.s32.totalorder %s230, %s231
      %p240 = scmp.eq.s32.totalorder %s30, 0
      %p241 = por %p239, %p240
      %p242 = scmp.ne.s32.totalorder %s230, %s231
      %p243 = scmp.eq.s32.totalorder %s31, 1
      %p244 = por %p242, %p243
      %p246 = scmp.ne.s32.totalorder %s231, %s245
      %p247 = scmp.eq.s32.totalorder %s31, 0
      %p248 = por %p246, %p247
      %s250 = sadd.s32 %s249, 1
      %p253 = scmp.eq.s32.totalorder %s25, 1
      %p254 = scmp.ne.s32.totalorder %s249, %s251
      %p255 = scmp.eq.s32.totalorder %s25, 0
      %p256 = por %p254, %p255
      %p257 = scmp.ne.s32.totalorder %s249, %s251
      %p258 = scmp.eq.s32.totalorder %s30, 1
      %p259 = por %p257, %p258
      %p260 = scmp.ne.s32.totalorder %s251, %s252
      %p261 = scmp.eq.s32.totalorder %s30, 0
      %p262 = por %p260, %p261
      %p263 = scmp.ne.s32.totalorder %s251, %s252
      %p264 = scmp.eq.s32.totalorder %s31, 1
      %p265 = por %p263, %p264
      %p267 = scmp.ne.s32.totalorder %s252, %s266
      %p268 = scmp.eq.s32.totalorder %s31, 0
      %p269 = por %p267, %p268
      %s271 = sadd.s32 %s270, 1
      %p274 = scmp.eq.s32.totalorder %s25, 1
      %p275 = scmp.ne.s32.totalorder %s270, %s272
      %p276 = scmp.eq.s32.totalorder %s25, 0
      %p277 = por %p275, %p276
      %p278 = scmp.ne.s32.totalorder %s270, %s272
      %p279 = scmp.eq.s32.totalorder %s30, 1
      %p280 = por %p278, %p279
      %p281 = scmp.ne.s32.totalorder %s272, %s273
      %p282 = scmp.eq.s32.totalorder %s30, 0
      %p283 = por %p281, %p282
      %p284 = scmp.ne.s32.totalorder %s272, %s273
      %p285 = scmp.eq.s32.totalorder %s31, 1
      %p286 = por %p284, %p285
      %p288 = scmp.ne.s32.totalorder %s273, %s287
      %p289 = scmp.eq.s32.totalorder %s31, 0
      %p290 = por %p288, %p289
      %s291 = ssub.s32 %s32, %s44
      %p292 = scmp.eq.s32.totalorder %s291, 0
      %s294 = sadd.s32 %s293, 1
      %s295 = scalar_select %p292, %s293, %s294
      %p298 = pneg %p292
      %p299 = scmp.eq.s32.totalorder %s25, 1
      %p300 = por %p298, %p299
      %p301 = scmp.ne.s32.totalorder %s293, %s296
      %p302 = scmp.eq.s32.totalorder %s25, 0
      %p303 = por %p301, %p302
      %p304 = scmp.ne.s32.totalorder %s293, %s296
      %p305 = scmp.eq.s32.totalorder %s30, 1
      %p306 = por %p304, %p305
      %p307 = scmp.ne.s32.totalorder %s296, %s297
      %p308 = scmp.eq.s32.totalorder %s30, 0
      %p309 = por %p307, %p308
      %p310 = scmp.ne.s32.totalorder %s296, %s297
      %p311 = scmp.eq.s32.totalorder %s31, 1
      %p312 = por %p310, %p311
      %p314 = scmp.ne.s32.totalorder %s297, %s313
      %p315 = scmp.eq.s32.totalorder %s31, 0
      %p316 = por %p314, %p315
      %p317 = scmp.le.s32.totalorder 1, %s25
      %p318 = scmp.lt.s32.totalorder %s25, 3
      %p319 = pnand %p317, %p318
      %p320 = pneg %p319
      // Predicated region
      $region9: #{tpu_custom_call.1} parent=5 // pred_check
        _
      $region10: #{tpu_custom_call.1} parent=5 // pred_check_branch
        %322 = sbr.rel (%p319) target = $region12
      $region11: #{tpu_custom_call.1} parent=5 // pred_region
        %s323 = ssub.s32 %s25, 1
        // Predicated region
        $region13: #{tpu_custom_call.1} parent=11 // pred_check
          %p324 = pneg %p84
        $region14: #{tpu_custom_call.1} parent=11 // pred_check_branch
          %326 = sbr.rel (%p324) target = $region16
        $region15: #{tpu_custom_call.1} parent=11 // pred_region
          %s328 = ssub.s32 16, 16
          %329 = vsyncadd [#allocation10], %s328
          %s331 = sshll.u32 [#allocation9], 4
          %s332 = int_to_ptr.vmem [resolvable:$true] %s331
          %334 = dma.hbm_to_vmem [thread:$0]  %s1, 16, %s332, [#allocation10]
        $region16: #{tpu_custom_call.1} parent=11 // pred_fallthru
          _
        // Predicated region
        $region17: #{tpu_custom_call.1} parent=11 // pred_check
          %p335 = pneg %p105
        $region18: #{tpu_custom_call.1} parent=11 // pred_check_branch
          %337 = sbr.rel (%p335) target = $region20
        $region19: #{tpu_custom_call.1} parent=11 // pred_region
          %s339 = ssub.s32 128, 128
          %340 = vsyncadd [#allocation10], %s339
          %s341 = sshll.u32 [#allocation11], 4
          %s342 = int_to_ptr.vmem [resolvable:$true] %s341
          %347 = dma.hbm_to_vmem [thread:$0]  %s2, 128, %s342, [#allocation10], 64, 64, 4
        $region20: #{tpu_custom_call.1} parent=11 // pred_fallthru
          _
        // Predicated region
        $region21: #{tpu_custom_call.1} parent=11 // pred_check
          %p348 = pneg %p126
        $region22: #{tpu_custom_call.1} parent=11 // pred_check_branch
          %350 = sbr.rel (%p348) target = $region24
        $region23: #{tpu_custom_call.1} parent=11 // pred_region
          _
        $region24: #{tpu_custom_call.1} parent=11 // pred_fallthru
          _
        // Predicated region
        $region25: #{tpu_custom_call.1} parent=11 // pred_check
          %p351 = pneg %p152
        $region26: #{tpu_custom_call.1} parent=11 // pred_check_branch
          %353 = sbr.rel (%p351) target = $region28
        $region27: #{tpu_custom_call.1} parent=11 // pred_region
          %s355 = ssub.s32 1024, 1024
          %356 = vsyncadd [#allocation13], %s355
          %s357 = smul.addr %s35, 64
          %s358 = scalar_lea.hbm %s4, %s357
          %s359 = sshll.u32 [#allocation12], 4
          %s360 = int_to_ptr.vmem [resolvable:$true] %s359
          %365 = dma.hbm_to_vmem [thread:$0]  %s358, 1024, %s360, [#allocation13], 64, 64, 4
        $region28: #{tpu_custom_call.1} parent=11 // pred_fallthru
          _
        // Predicated region
        $region29: #{tpu_custom_call.1} parent=11 // pred_check
          %p366 = pneg %p178
        $region30: #{tpu_custom_call.1} parent=11 // pred_check_branch
          %368 = sbr.rel (%p366) target = $region32
        $region31: #{tpu_custom_call.1} parent=11 // pred_region
          %p369 = scmp.lt.s32.totalorder %s35, 0
          %s370 = scalar_select %p369, %s35, 0
          %s371 = scalar_lea.vmem %s5, %s370
        $region32: #{tpu_custom_call.1} parent=11 // pred_fallthru
          _
        // Predicated region
        $region33: #{tpu_custom_call.1} parent=11 // pred_check
          %p372 = pneg %p199
        $region34: #{tpu_custom_call.1} parent=11 // pred_check_branch
          %374 = sbr.rel (%p372) target = $region36
        $region35: #{tpu_custom_call.1} parent=11 // pred_region
          _
        $region36: #{tpu_custom_call.1} parent=11 // pred_fallthru
          _
        // Predicated region
        $region37: #{tpu_custom_call.1} parent=11 // pred_check
          %p375 = pneg %p220
        $region38: #{tpu_custom_call.1} parent=11 // pred_check_branch
          %377 = sbr.rel (%p375) target = $region40
        $region39: #{tpu_custom_call.1} parent=11 // pred_region
          _
        $region40: #{tpu_custom_call.1} parent=11 // pred_fallthru
          _
        // Predicated region
        $region41: #{tpu_custom_call.1} parent=11 // pred_check
          %p378 = pneg %p241
        $region42: #{tpu_custom_call.1} parent=11 // pred_check_branch
          %380 = sbr.rel (%p378) target = $region44
        $region43: #{tpu_custom_call.1} parent=11 // pred_region
          _
        $region44: #{tpu_custom_call.1} parent=11 // pred_fallthru
          _
        // Predicated region
        $region45: #{tpu_custom_call.1} parent=11 // pred_check
          %p381 = pneg %p262
        $region46: #{tpu_custom_call.1} parent=11 // pred_check_branch
          %383 = sbr.rel (%p381) target = $region48
        $region47: #{tpu_custom_call.1} parent=11 // pred_region
          _
        $region48: #{tpu_custom_call.1} parent=11 // pred_fallthru
          _
        // Predicated region
        $region49: #{tpu_custom_call.1} parent=11 // pred_check
          %p384 = pneg %p283
        $region50: #{tpu_custom_call.1} parent=11 // pred_check_branch
          %386 = sbr.rel (%p384) target = $region52
        $region51: #{tpu_custom_call.1} parent=11 // pred_region
          _
        $region52: #{tpu_custom_call.1} parent=11 // pred_fallthru
          _
      $region12: #{tpu_custom_call.1} parent=5 // pred_fallthru
        _
      %p387 = scmp.lt.s32.totalorder %s25, 2
      // Predicated region
      $region53: #{tpu_custom_call.1} parent=5 // pred_check
        %p388 = pneg %p387
      $region54: #{tpu_custom_call.1} parent=5 // pred_check_branch
        %390 = sbr.rel (%p388) target = $region56
      $region55: #{tpu_custom_call.1} parent=5 // pred_region
        // Predicated region
        $region57: #{tpu_custom_call.1} parent=55 // pred_check
          %p391 = pneg %p57
        $region58: #{tpu_custom_call.1} parent=55 // pred_check_branch
          %393 = sbr.rel (%p391) target = $region60
        $region59: #{tpu_custom_call.1} parent=55 // pred_region
          %s394 = sand.u32 %s47, 1
          %s395 = scalar_lea.sflag [#allocation7], %s394
          %s396 = sand.u32 %s47, 1
          %s397 = smul.addr %s396, 4
          %s398 = scalar_lea.vmem [#allocation6], %s397
          %s400 = ssub.s32 64, 64
          %401 = vsyncadd %s395, %s400
          %s402 = smul.addr %s32, 2
          %s403 = smul.addr %s402, 32
          %s404 = scalar_lea.hbm %s0, %s403
          %s406 = sshll.u32 %s398, 4
          %s407 = int_to_ptr.vmem [resolvable:$true] %s406
          %409 = dma.hbm_to_vmem [thread:$0]  %s404, 64, %s407, %s395
        $region60: #{tpu_custom_call.1} parent=55 // pred_fallthru
          _
      $region56: #{tpu_custom_call.1} parent=5 // pred_fallthru
        _
      %p410 = scmp.le.s32.totalorder 1, %s25
      %p411 = scmp.lt.s32.totalorder %s25, 3
      %p412 = pnand %p410, %p411
      %p413 = pneg %p412
      // Predicated region
      $region61: #{tpu_custom_call.1} parent=5 // pred_check
        _
      $region62: #{tpu_custom_call.1} parent=5 // pred_check_branch
        %415 = sbr.rel (%p412) target = $region64
      $region63: #{tpu_custom_call.1} parent=5 // pred_region
        %s416 = ssub.s32 %s25, 1
        %s417 = sand.u32 %s50, 1
        %s418 = scalar_lea.sflag [#allocation7], %s417
        %s419 = sand.u32 %s50, 1
        %s420 = smul.addr %s419, 4
        %s421 = scalar_lea.vmem [#allocation6], %s420
        // Predicated region
        $region65: #{tpu_custom_call.1} parent=63 // pred_check
          %p422 = pneg %p63
        $region66: #{tpu_custom_call.1} parent=63 // pred_check_branch
          %424 = sbr.rel (%p422) target = $region68
        $region67: #{tpu_custom_call.1} parent=63 // pred_region
          %425 = dma.done %s418, 64
        $region68: #{tpu_custom_call.1} parent=63 // pred_fallthru
          _
        // Predicated region
        $region69: #{tpu_custom_call.1} parent=63 // pred_check
          %p426 = pneg %p84
        $region70: #{tpu_custom_call.1} parent=63 // pred_check_branch
          %428 = sbr.rel (%p426) target = $region72
        $region71: #{tpu_custom_call.1} parent=63 // pred_region
          %429 = dma.done [#allocation10], 16
        $region72: #{tpu_custom_call.1} parent=63 // pred_fallthru
          _
        // Predicated region
        $region73: #{tpu_custom_call.1} parent=63 // pred_check
          %p430 = pneg %p105
        $region74: #{tpu_custom_call.1} parent=63 // pred_check_branch
          %432 = sbr.rel (%p430) target = $region76
        $region75: #{tpu_custom_call.1} parent=63 // pred_region
          %433 = dma.done [#allocation10], 128
        $region76: #{tpu_custom_call.1} parent=63 // pred_fallthru
          _
        // Predicated region
        $region77: #{tpu_custom_call.1} parent=63 // pred_check
          %p434 = pneg %p152
        $region78: #{tpu_custom_call.1} parent=63 // pred_check_branch
          %436 = sbr.rel (%p434) target = $region80
        $region79: #{tpu_custom_call.1} parent=63 // pred_region
          %437 = dma.done [#allocation13], 1024
        $region80: #{tpu_custom_call.1} parent=63 // pred_fallthru
          _
        %s438 = sand.u32 %s50, 1
        %s439 = scalar_lea.sflag [#allocation7], %s438
        %s440 = sand.u32 %s50, 1
        %s441 = smul.addr %s440, 4
        %s442 = scalar_lea.vmem [#allocation6], %s441
        %p443 = pneg %p63
        %p444 = pneg %p60
        %p445 = pneg %p84
        %p446 = pneg %p81
        %p447 = pneg %p105
        %p448 = pneg %p102
        %p449 = pneg %p126
        %p450 = pneg %p123
        %p451 = pneg %p152
        %p452 = pneg %p149
        %p453 = scmp.lt.s32.totalorder %s35, 0
        %s454 = scalar_select %p453, %s35, 0
        %s455 = scalar_lea.vmem %s5, %s454
        %p456 = pneg %p178
        %p457 = pneg %p175
        %p458 = pneg %p199
        %p459 = pneg %p196
        %p460 = pneg %p220
        %p461 = pneg %p217
        %p462 = pneg %p241
        %p463 = pneg %p238
        %p464 = pneg %p262
        %p465 = pneg %p259
        %p466 = pneg %p283
        %p467 = pneg %p280
        %p468 = pneg %p309
        %p469 = pneg %p306
        %s470 = sand.u32 %s296, 1
        %s471 = scalar_lea.sflag [#allocation8], %s470
        %s472 = sand.u32 %s296, 1
        %s473 = scalar_lea.vmem [#allocation14], %s472
        %p474 = scmp.lt.s32.totalorder %s35, 0
        %s475 = scalar_select %p474, %s35, 0
        %s476 = scalar_lea.vmem %s5, %s475
        %p478 = scmp.eq.s32.totalorder %s35, 0
        // Predicated region
        $region81: #{tpu_custom_call.1} parent=63 // pred_check
          %p479 = pneg %p478
        $region82: #{tpu_custom_call.1} parent=63 // pred_check_branch
          %481 = sbr.rel (%p479) target = $region84
        $region83: #{tpu_custom_call.1} parent=63 // pred_region
          %v482 = vld [vmem:[%s421] sm:$0x3]
          %v483 = vunpack.c.l.bf16 %v482
          %484 = vst [vmem:[#allocation2] sm:$0xf] %v483
          %v485 = vld [vmem:[%s421] sm:$0xf]
          %v486 = vunpack.c.l.bf16 %v485
          %v488 = vcombine.high %v486, %v486
          %489 = vrot.lane.b32.xlu0 %v486, 127
          %v490 = vpop.permute.xlu0 %489
          %491 = vrot.lane.b32.xlu0 %v488, 127
          %v492 = vpop.permute.xlu0 %491
          %vm493 = vcmask 1039360
          %v494 = vsel %vm493, %v490, %v492
          %496 = vst [vmem:[#allocation2 + $0x4] sm:$0xf] %v494
          %v497 = vld [vmem:[%s421] sm:$0xf]
          %v498 = vunpack.c.l.bf16 %v497
          %v500 = vcombine.high %v498, %v498
          %501 = vrot.lane.b32.xlu0 %v498, 126
          %v502 = vpop.permute.xlu0 %501
          %503 = vrot.lane.b32.xlu0 %v500, 126
          %v504 = vpop.permute.xlu0 %503
          %vm505 = vcmask 1031168
          %v506 = vsel %vm505, %v502, %v504
          %508 = vst [vmem:[#allocation2 + $0x8] sm:$0xf] %v506
          %v509 = vld [vmem:[#allocation11] sm:$0xf]
          %v510 = vld [vmem:[#allocation11 + $0x4] sm:$0xf]
          %v511 = vld [vmem:[#allocation2] sm:$0xff]
          %v512 = vld [vmem:[#allocation2 + $0x8] sm:$0xf]
          %v513 = vpack.c.bf16 %v512, %v511
          %v514 = vld [vmem:[%s3] sm:$0xff]
          %v515 = vld [vmem:[%s3 + $0x8] sm:$0xff]
          %517 = vset.pattern.permute.xlu0 0
          %518 = vperm.xlu0 %517, %v514
          %v519 = vpop.permute.xlu0 %518
          %522 = vset.pattern.permute.xlu0 0
          %523 = vperm.xlu0 %522, %v515
          %v524 = vpop.permute.xlu0 %523
          %v528 = vunpack.c.l.b16 %v509
          %v529 = vunpack.c.l.b16 %v510
          %v530 = vpack.c.b16 %v529, %v528
          %vm531 = vcmask 97280
          %v533 = vsel %vm531, %v530, 0
          %vm535 = vcmask 1045504
          %v537 = vsel %vm535, %v513, 0
          %539 = vmatprep.subr.bf16.mxu0 0
          %540 = vmatpush1.bf16.msra.mxu0 %v537
          %541 = vmatprep.subr.bf16.mxu0 0
          %542 = vmatpush1.bf16.msra.mxu0 0
          %543 = vmatprep.subr.bf16.mxu0 0
          %544 = vmatpush1.bf16.msra.mxu0 0
          %545 = vmatprep.subr.bf16.mxu0 0
          %546 = vmatpush1.bf16.msra.mxu0 0
          %547 = vmatprep.subr.bf16.mxu0 0
          %548 = vmatpush1.bf16.msra.mxu0 0
          %549 = vmatprep.subr.bf16.mxu0 0
          %550 = vmatpush1.bf16.msra.mxu0 0
          %551 = vmatprep.subr.bf16.mxu0 0
          %552 = vmatpush1.bf16.msra.mxu0 0
          %553 = vmatprep.subr.bf16.mxu0 0
          %554 = vmatpush1.bf16.msra.mxu0 0
          %555 = vmatprep.subr.bf16.mxu0 0
          %556 = vmatpush1.bf16.msra.mxu0 0
          %557 = vmatprep.subr.bf16.mxu0 0
          %558 = vmatpush1.bf16.msra.mxu0 0
          %559 = vmatprep.subr.bf16.mxu0 0
          %560 = vmatpush1.bf16.msra.mxu0 0
          %561 = vmatprep.subr.bf16.mxu0 0
          %562 = vmatpush1.bf16.msra.mxu0 0
          %563 = vmatprep.subr.bf16.mxu0 0
          %564 = vmatpush1.bf16.msra.mxu0 0
          %565 = vmatprep.subr.bf16.mxu0 0
          %566 = vmatpush1.bf16.msra.mxu0 0
          %567 = vmatprep.subr.bf16.mxu0 0
          %568 = vmatpush1.bf16.msra.mxu0 0
          %569 = vmatprep.subr.bf16.mxu0 0
          %570 = vmatpush1.bf16.msra.mxu0 0
          %571 = vmatprep.mubr.bf16.mxu0 0
          %572 = vmatmul.mubr.bf16.gmra.mrb[0].mxu0 %v533
          %v573 = vpop.f32.mrb[0].mxu0
          %v574 = vadd.f32 %v519, %v573
          %v575 = vpop.f32.mrb[0].mxu0
          %v576 = vpop.f32.mrb[0].mxu0
          %v577 = vadd.f32 %v524, %v576
          %v578 = vpop.f32.mrb[0].mxu0
          %579 = vdwg.mxu0
          %v580 = vmax.f32 %v574, 0.0
          %v581 = vmax.f32 %v577, 0.0
          %v582 = vld [vmem:[#allocation9] sm:$0x1]
          %v584 = vlaneseq
          %v585 = vshrl.u32 %v584, 7
          %v586 = vsub.s32 0, %v585
          %v587 = vrot.slane %v582, %v586
          %v589 = vmul.f32 %v580, %v587
          %v590 = vmul.f32 %v581, %v587
          %591 = vst [vmem:[#allocation3] sm:$0xff] %v589
          %592 = vst [vmem:[#allocation3 + $0x8] sm:$0xff] %v590
          %v593 = vpack.c.bf16 %v590, %v589
          %594 = vst [vmem:[#allocation4] sm:$0xff] %v593
          %vm595 = vcmask 7168
          %596 = vst.msk [vmem:[#allocation5] sm:$0xff] %vm595, 0.0
          %597 = vst.msk [vmem:[#allocation5 + $0x8] sm:$0xff] %vm595, 0.0
        $region84: #{tpu_custom_call.1} parent=63 // pred_fallthru
          _
        %v598 = vld [vmem:[#allocation4] sm:$0xff]
        %v599 = vld [vmem:[#allocation12] sm:$0xf]
        %v600 = vld [vmem:[#allocation12 + $0x4] sm:$0xf]
        %v601 = vld [vmem:[#allocation12 + $0x8] sm:$0xf]
        %v602 = vld [vmem:[#allocation12 + $0xc] sm:$0xf]
        %v603 = vld [vmem:[#allocation12 + $0x10] sm:$0xf]
        %v604 = vld [vmem:[#allocation12 + $0x14] sm:$0xf]
        %v605 = vld [vmem:[#allocation12 + $0x18] sm:$0xf]
        %v606 = vld [vmem:[#allocation12 + $0x1c] sm:$0xf]
        %v607 = vld [vmem:[#allocation12 + $0x20] sm:$0xf]
        %v608 = vld [vmem:[#allocation12 + $0x24] sm:$0xf]
        %v609 = vld [vmem:[#allocation12 + $0x28] sm:$0xf]
        %v610 = vld [vmem:[#allocation12 + $0x2c] sm:$0xf]
        %v611 = vld [vmem:[#allocation12 + $0x30] sm:$0xf]
        %v612 = vld [vmem:[#allocation12 + $0x34] sm:$0xf]
        %v613 = vld [vmem:[#allocation12 + $0x38] sm:$0xf]
        %v614 = vld [vmem:[#allocation12 + $0x3c] sm:$0xf]
        %v615 = vld [vmem:[%s476] sm:$0x1]
        %v617 = vlaneseq
        %v618 = vshrl.u32 %v617, 7
        %v619 = vsub.s32 0, %v618
        %v620 = vrot.slane %v615, %v619
        %v638 = vunpack.c.l.b16 %v599
        %v639 = vunpack.c.l.b16 %v600
        %v640 = vunpack.c.l.b16 %v601
        %v641 = vunpack.c.l.b16 %v602
        %v642 = vunpack.c.l.b16 %v603
        %v643 = vunpack.c.l.b16 %v604
        %v644 = vunpack.c.l.b16 %v605
        %v645 = vunpack.c.l.b16 %v606
        %v646 = vunpack.c.l.b16 %v607
        %v647 = vunpack.c.l.b16 %v608
        %v648 = vunpack.c.l.b16 %v609
        %v649 = vunpack.c.l.b16 %v610
        %v650 = vunpack.c.l.b16 %v611
        %v651 = vunpack.c.l.b16 %v612
        %v652 = vunpack.c.l.b16 %v613
        %v653 = vunpack.c.l.b16 %v614
        %v654 = vpack.c.b16 %v639, %v638
        %v655 = vpack.c.b16 %v641, %v640
        %v656 = vpack.c.b16 %v643, %v642
        %v657 = vpack.c.b16 %v645, %v644
        %v658 = vpack.c.b16 %v647, %v646
        %v659 = vpack.c.b16 %v649, %v648
        %v660 = vpack.c.b16 %v651, %v650
        %v661 = vpack.c.b16 %v653, %v652
        %670 = vmatprep.subr.bf16.mxu0 0
        %671 = vmatpush1.bf16.msra.mxu0 %v654
        %672 = vmatprep.subr.bf16.mxu0 0
        %673 = vmatpush1.bf16.msra.mxu0 %v655
        %674 = vmatprep.subr.bf16.mxu0 0
        %675 = vmatpush1.bf16.msra.mxu0 %v656
        %676 = vmatprep.subr.bf16.mxu0 0
        %677 = vmatpush1.bf16.msra.mxu0 %v657
        %678 = vmatprep.subr.bf16.mxu0 0
        %679 = vmatpush1.bf16.msra.mxu0 %v658
        %680 = vmatprep.subr.bf16.mxu0 0
        %681 = vmatpush1.bf16.msra.mxu0 %v659
        %682 = vmatprep.subr.bf16.mxu0 0
        %683 = vmatpush1.bf16.msra.mxu0 %v660
        %684 = vmatprep.subr.bf16.mxu0 0
        %685 = vmatpush1.bf16.msra.mxu0 %v661
        %686 = vmatprep.subr.bf16.mxu0 0
        %687 = vmatpush1.bf16.msra.mxu0 0
        %688 = vmatprep.subr.bf16.mxu0 0
        %689 = vmatpush1.bf16.msra.mxu0 0
        %690 = vmatprep.subr.bf16.mxu0 0
        %691 = vmatpush1.bf16.msra.mxu0 0
        %692 = vmatprep.subr.bf16.mxu0 0
        %693 = vmatpush1.bf16.msra.mxu0 0
        %694 = vmatprep.subr.bf16.mxu0 0
        %695 = vmatpush1.bf16.msra.mxu0 0
        %696 = vmatprep.subr.bf16.mxu0 0
        %697 = vmatpush1.bf16.msra.mxu0 0
        %698 = vmatprep.subr.bf16.mxu0 0
        %699 = vmatpush1.bf16.msra.mxu0 0
        %700 = vmatprep.subr.bf16.mxu0 0
        %701 = vmatpush1.bf16.msra.mxu0 0
        %702 = vmatprep.mubr.bf16.mxu0 0
        %703 = vmatmul.mubr.bf16.gmra.mrb[0].mxu0 %v598
        %v704 = vpop.f32.mrb[0].mxu0
        %v705 = vadd.f32 %v620, %v704
        %v706 = vpop.f32.mrb[0].mxu0
        %v707 = vpop.f32.mrb[0].mxu0
        %v708 = vadd.f32 %v620, %v707
        %v709 = vpop.f32.mrb[0].mxu0
        %710 = vdwg.mxu0
        %v711 = vtanh.pop %v705
        %v712 = vtanh.pop %v708
        %v713 = vmax.f32 %v711, %v712
        %v714 = vrot.slane %v713, 4
        %v715 = vmax.f32 %v713, %v714
        %v716 = vrot.slane %v715, 2
        %v717 = vmax.f32 %v715, %v716
        %v718 = vrot.slane %v717, 1
        %v719 = vmax.f32 %v717, %v718
        %v720 = vsub.f32 %v711, %v719
        %v721 = vsub.f32 %v712, %v719
        %v722 = vmul.f32 %v720, 1.442695
        %v723 = vpow.pop %v722
        %v724 = vmul.f32 %v721, 1.442695
        %v725 = vpow.pop %v724
        %v726 = vadd.f32 %v723, %v725
        %v727 = vrot.slane %v726, 4
        %v728 = vadd.f32 %v726, %v727
        %v729 = vrot.slane %v728, 2
        %v730 = vadd.f32 %v728, %v729
        %v731 = vrot.slane %v730, 1
        %v732 = vadd.f32 %v730, %v731
        %v733 = vrcp.pop %v732
        %v734 = vmul.f32 %v723, %v733
        %v735 = vmul.f32 %v725, %v733
        %s736 = smul.u32 %s35, 128
        %s737 = sshra.s32 %s736, 7
        %s738 = sand.u32 %s736, 127
        %s739 = scalar_lea.vmem [#allocation3], %s737
        %v740 = vld [vmem:[%s739] sm:$0xff]
        %v741 = vld [vmem:[%s739 + $0x8] sm:$0xff]
        %v742 = vmul.f32 %v734, %v740
        %v743 = vmul.f32 %v735, %v741
        %v744 = vld [vmem:[#allocation5] sm:$0xff]
        %v745 = vld [vmem:[#allocation5 + $0x8] sm:$0xff]
        %746 = vadd.xlane.f32.xlu0 %v742
        %v747 = vpop.xlane.xlu0 %746
        %748 = vadd.xlane.f32.xlu0 %v743
        %v749 = vpop.xlane.xlu0 %748
        %v750 = vadd.f32 %v744, %v747
        %v751 = vadd.f32 %v745, %v749
        %vm752 = vcmask 7168
        %753 = vst.msk [vmem:[#allocation5] sm:$0xff] %vm752, %v750
        %754 = vst.msk [vmem:[#allocation5 + $0x8] sm:$0xff] %vm752, %v751
        // Predicated region
        $region85: #{tpu_custom_call.1} parent=63 // pred_check
          %p755 = pneg %p478
        $region86: #{tpu_custom_call.1} parent=63 // pred_check_branch
          %757 = sbr.rel (%p755) target = $region88
        $region87: #{tpu_custom_call.1} parent=63 // pred_region
          %v758 = vld [vmem:[#allocation5] sm:$0xff]
          %v759 = vld [vmem:[#allocation5 + $0x8] sm:$0xff]
          %v760 = vld [vmem:[#allocation3] sm:$0xff]
          %v761 = vld [vmem:[#allocation3 + $0x8] sm:$0xff]
          %762 = vadd.xlane.f32.xlu0 %v760
          %v763 = vpop.xlane.xlu0 %762
          %764 = vadd.xlane.f32.xlu0 %v761
          %v765 = vpop.xlane.xlu0 %764
          %v766 = vld [vmem:[%s6] sm:$0xff]
          %v767 = vld [vmem:[%s6 + $0x8] sm:$0xff]
          %769 = vset.pattern.permute.xlu0 0
          %770 = vperm.xlu0 %769, %v758
          %v771 = vpop.permute.xlu0 %770
          %774 = vset.pattern.permute.xlu0 0
          %775 = vperm.xlu0 %774, %v759
          %v776 = vpop.permute.xlu0 %775
          %v778 = vmul.f32 %v771, %v766
          %v779 = vmul.f32 %v776, %v767
          %vm780 = vcmask 130048
          %v781 = vsel %vm780, %v778, 0.0
          %v782 = vsel %vm780, %v779, 0.0
          %v783 = vadd.f32 %v781, %v782
          %v784 = vrot.slane %v783, 4
          %v785 = vadd.f32 %v783, %v784
          %v786 = vrot.slane %v785, 2
          %v787 = vadd.f32 %v785, %v786
          %v788 = vrot.slane %v787, 1
          %v789 = vadd.f32 %v787, %v788
          %v790 = vld [vmem:[%s7] sm:$0xff]
          %v791 = vld [vmem:[%s7 + $0x8] sm:$0xff]
          %v792 = vmul.f32 %v763, %v790
          %v793 = vmul.f32 %v765, %v791
          %v794 = vsel %vm780, %v792, 0.0
          %v795 = vsel %vm780, %v793, 0.0
          %v796 = vadd.f32 %v794, %v795
          %v797 = vrot.slane %v796, 4
          %v798 = vadd.f32 %v796, %v797
          %v799 = vrot.slane %v798, 2
          %v800 = vadd.f32 %v798, %v799
          %v801 = vrot.slane %v800, 1
          %v802 = vadd.f32 %v800, %v801
          %v803 = vadd.f32 %v789, %v802
          %v804 = vld [vmem:[%s8] sm:$0x1]
          %v805 = vadd.f32 %v803, %v804
          %v806 = vmax.f32 %v805, 0.0
          %v807 = vld [vmem:[%s9] sm:$0xff]
          %v808 = vld [vmem:[%s9 + $0x8] sm:$0xff]
          %v809 = vld [vmem:[%s10] sm:$0x1]
          %v811 = vsel %vm780, %v806, 0
          %813 = vmatprep.subr.mxu0 0.0
          %814 = vmatpush1.msra.mxu0 %v807
          %815 = vmatprep.subr.mxu0 0.0
          %816 = vmatpush1.msra.mxu0 %v808
          %817 = vmatprep.subr.mxu0 0.0
          %818 = vmatpush1.msra.mxu0 0.0
          %819 = vmatprep.subr.mxu0 0.0
          %820 = vmatpush1.msra.mxu0 0.0
          %821 = vmatprep.subr.mxu0 0.0
          %822 = vmatpush1.msra.mxu0 0.0
          %823 = vmatprep.subr.mxu0 0.0
          %824 = vmatpush1.msra.mxu0 0.0
          %825 = vmatprep.subr.mxu0 0.0
          %826 = vmatpush1.msra.mxu0 0.0
          %827 = vmatprep.subr.mxu0 0.0
          %828 = vmatpush1.msra.mxu0 0.0
          %829 = vmatprep.subr.mxu0 0.0
          %830 = vmatpush1.msra.mxu0 0.0
          %831 = vmatprep.subr.mxu0 0.0
          %832 = vmatpush1.msra.mxu0 0.0
          %833 = vmatprep.subr.mxu0 0.0
          %834 = vmatpush1.msra.mxu0 0.0
          %835 = vmatprep.subr.mxu0 0.0
          %836 = vmatpush1.msra.mxu0 0.0
          %837 = vmatprep.subr.mxu0 0.0
          %838 = vmatpush1.msra.mxu0 0.0
          %839 = vmatprep.subr.mxu0 0.0
          %840 = vmatpush1.msra.mxu0 0.0
          %841 = vmatprep.subr.mxu0 0.0
          %842 = vmatpush1.msra.mxu0 0.0
          %843 = vmatprep.subr.mxu0 0.0
          %844 = vmatpush1.msra.mxu0 0.0
          %845 = vmatprep.subr.mxu0 0.0
          %846 = vmatpush1.msra.mxu0 0.0
          %847 = vmatprep.subr.mxu0 0.0
          %848 = vmatpush1.msra.mxu0 0.0
          %849 = vmatprep.subr.mxu0 0.0
          %850 = vmatpush1.msra.mxu0 0.0
          %851 = vmatprep.subr.mxu0 0.0
          %852 = vmatpush1.msra.mxu0 0.0
          %853 = vmatprep.subr.mxu0 0.0
          %854 = vmatpush1.msra.mxu0 0.0
          %855 = vmatprep.subr.mxu0 0.0
          %856 = vmatpush1.msra.mxu0 0.0
          %857 = vmatprep.subr.mxu0 0.0
          %858 = vmatpush1.msra.mxu0 0.0
          %859 = vmatprep.subr.mxu0 0.0
          %860 = vmatpush1.msra.mxu0 0.0
          %861 = vmatprep.subr.mxu0 0.0
          %862 = vmatpush1.msra.mxu0 0.0
          %863 = vmatprep.subr.mxu0 0.0
          %864 = vmatpush1.msra.mxu0 0.0
          %865 = vmatprep.subr.mxu0 0.0
          %866 = vmatpush1.msra.mxu0 0.0
          %867 = vmatprep.subr.mxu0 0.0
          %868 = vmatpush1.msra.mxu0 0.0
          %869 = vmatprep.subr.mxu0 0.0
          %870 = vmatpush1.msra.mxu0 0.0
          %871 = vmatprep.subr.mxu0 0.0
          %872 = vmatpush1.msra.mxu0 0.0
          %873 = vmatprep.subr.mxu0 0.0
          %874 = vmatpush1.msra.mxu0 0.0
          %875 = vmatprep.subr.mxu0 0.0
          %876 = vmatpush1.msra.mxu0 0.0
          %877 = vmatprep.mubr.f32.mxu0 0.0
          %878 = vmatmul.mubr.f32.gmra.mrb[0].mxu0 %v811
          %v879 = vpop.f32.mrb[0].mxu0
          %v880 = vadd.f32 %v809, %v879
          %v881 = vpop.f32.mrb[0].mxu0
          %882 = vdwg.mxu0
          %vm883 = vcmask 401408
          %884 = vst.msk [vmem:[%s473] sm:$0x1] %vm883, %v880
        $region88: #{tpu_custom_call.1} parent=63 // pred_fallthru
          _
        %s885 = sand.u32 %s296, 1
        %s886 = scalar_lea.sflag [#allocation8], %s885
        %s887 = sand.u32 %s296, 1
        %s888 = scalar_lea.vmem [#allocation14], %s887
        // Predicated region
        $region89: #{tpu_custom_call.1} parent=63 // pred_check
          %p889 = pneg %p306
        $region90: #{tpu_custom_call.1} parent=63 // pred_check_branch
          %891 = sbr.rel (%p889) target = $region92
        $region91: #{tpu_custom_call.1} parent=63 // pred_region
          %s893 = ssub.s32 16, 16
          %894 = vsyncadd %s886, %s893
          %s895 = smul.addr %s34, 16
          %s896 = scalar_lea.hbm %s11, %s895
          %s898 = sshll.u32 %s888, 4
          %s899 = int_to_ptr.vmem [resolvable:$true] %s898
          %901 = dma.vmem_to_hbm [thread:$0]  %s899, 16, %s896, %s886
        $region92: #{tpu_custom_call.1} parent=63 // pred_fallthru
          _
      $region64: #{tpu_custom_call.1} parent=5 // pred_fallthru
        _
      %p902 = scmp.le.s32.totalorder 2, %s25
      // Predicated region
      $region93: #{tpu_custom_call.1} parent=5 // pred_check
        %p903 = pneg %p902
      $region94: #{tpu_custom_call.1} parent=5 // pred_check_branch
        %905 = sbr.rel (%p903) target = $region96
      $region95: #{tpu_custom_call.1} parent=5 // pred_region
        %s906 = ssub.s32 %s25, 2
        // Predicated region
        $region97: #{tpu_custom_call.1} parent=95 // pred_check
          %p907 = pneg %p312
        $region98: #{tpu_custom_call.1} parent=95 // pred_check_branch
          %909 = sbr.rel (%p907) target = $region100
        $region99: #{tpu_custom_call.1} parent=95 // pred_region
          %s910 = sand.u32 %s297, 1
          %s911 = scalar_lea.sflag [#allocation8], %s910
          %s912 = sand.u32 %s297, 1
          %s913 = scalar_lea.vmem [#allocation14], %s912
          %914 = dma.done %s911, 16
        $region100: #{tpu_custom_call.1} parent=95 // pred_fallthru
          _
      $region96: #{tpu_custom_call.1} parent=5 // pred_fallthru
        _
    $region6: #{tpu_custom_call.1} parent=1 // loop_footer
      %s29 = sadd.s32 1, %s25
    $region7: #{tpu_custom_call.1} parent=1 // loop_footer_branch
      %24 = sbr.rel target = $region3
    $region8: #{tpu_custom_call.1} parent=1 // loop_exit
      _
    %915 = vsyncpa [#allocation7], 1
    %s916 = scalar_lea.sflag [#allocation7], 1
    %917 = vsyncpa %s916, 1
    %918 = vsyncpa [#allocation10], 1
    %919 = vsyncpa [#allocation13], 1
    %920 = vsyncpa [#allocation8], 1
    %s921 = scalar_lea.sflag [#allocation8], 1
    %922 = vsyncpa %s921, 1

</llo_original>
